<compile_context>
chip_gen: v5e
topology: v5e:2x2
jax: 0.10.0
libtpu: 0.0.40
codegen_flags: <defaults>
</compile_context>

<pallas_src>
import functools
import math

import jax
import jax.numpy as jnp
from jax.experimental import pallas as pl
from jax.experimental.pallas import tpu as pltpu  # noqa: F401  (TPU backend)


# ----------------------------- in-kernel helpers ---------------------------- #

def _layer_norm(x, g, b, eps=1e-12):
    mean = jnp.mean(x, axis=-1, keepdims=True)
    var = jnp.mean((x - mean) ** 2, axis=-1, keepdims=True)
    return (x - mean) * jax.lax.rsqrt(var + eps) * g + b


def _gelu(y):
    # TODO(synk): HF BERT uses exact erf-GELU; tanh approximation used here
    # (erf lowering in Mosaic is not guaranteed; difference is ~1e-3).
    c = math.sqrt(2.0 / math.pi)
    return 0.5 * y * (1.0 + jnp.tanh(c * (y + 0.044715 * y * y * y)))


def _softmax_rows(s):
    m = jnp.max(s, axis=-1, keepdims=True)
    e = jnp.exp(s - m)
    # reciprocal goes to the (otherwise idle) EUP slot
    return e * pl.reciprocal(jnp.sum(e, axis=-1, keepdims=True), approx=True)


# -------------------------------- fused kernel ------------------------------ #

def _fused_forward_kernel(*refs, num_layers, B, S, NH, Dh, H, mode):
    """Entire Title2ContentModel forward in one kernel; everything VMEM-resident."""
    idx = 0

    def nxt():
        nonlocal idx
        r = refs[idx]
        idx += 1
        return r

    ids = nxt()[...]                  # [M, 1] int32
    attn_mask = nxt()[...]            # [B, S] float32 (1 = keep, 0 = pad)
    word_emb = nxt()[...]             # [V, H]
    pos_type = nxt()[...]             # [S, H]  (position + token-type-0 embeddings)
    emb_g = nxt()[...]                # [1, H]
    emb_b = nxt()[...]                # [1, H]
    layers = [tuple(nxt()[...] for _ in range(12)) for _ in range(num_layers)]
    w_out = nxt()[...]                # [H, V]
    b_out = nxt()[...]                # [1, V]
    labels = nxt()[...] if mode == "loss" else None   # [M, 1] int32
    out_ref = refs[idx]

    M = B * S
    V = word_emb.shape[0]

    # ---- embeddings: token gather as one-hot MXU matmul + pos/type + LayerNorm
    iota_v = jax.lax.broadcasted_iota(jnp.int32, (M, V), 1)
    onehot = (iota_v == ids).astype(jnp.float32)                      # [M, V]
    x = jnp.dot(onehot, word_emb, preferred_element_type=jnp.float32)  # [M, H]
    x = x + jnp.concatenate([pos_type] * B, axis=0)                   # batch bcast
    x = _layer_norm(x, emb_g, emb_b)

    # ---- HF-style additive attention mask: (1 - mask) * -1e9
    add_mask = (1.0 - attn_mask) * -1e9                               # [B, S]

    scale = 1.0 / math.sqrt(Dh)
    for (wqkv, bqkv, wo, bo, aln_g, aln_b,
         w1, b1, w2, b2, fln_g, fln_b) in layers:
        # fused QKV projection: one [M,H] @ [H,3H] matmul (was 3 separate calls)
        qkv = jnp.dot(x, wqkv, preferred_element_type=jnp.float32) + bqkv
        q = qkv[:, 0:H]
        k = qkv[:, H:2 * H]
        v = qkv[:, 2 * H:3 * H]

        # attention: static (batch, head) slices, fully unrolled inside the kernel
        ctx_rows = []
        for b in range(B):
            rs, re = b * S, (b + 1) * S
            mask_b = add_mask[b:b + 1, :]                             # [1, S]
            head_ctx = []
            for h in range(NH):
                cs, ce = h * Dh, (h + 1) * Dh
                qh = q[rs:re, cs:ce]                                  # [S, Dh]
                kh = k[rs:re, cs:ce]
                vh = v[rs:re, cs:ce]
                s = jax.lax.dot_general(qh, kh, (((1,), (1,)), ((), ())),
                                        preferred_element_type=jnp.float32)
                s = s * scale + mask_b                                # [S, S]
                # note: fully-padded query rows softmax uniformly; their outputs
                # are discarded downstream (matches the HF/PyTorch reference).
                p = _softmax_rows(s)
                head_ctx.append(jnp.dot(p, vh, preferred_element_type=jnp.float32))
            ctx_rows.append(jnp.concatenate(head_ctx, axis=1))        # [S, H]
        ctx = jnp.concatenate(ctx_rows, axis=0)                       # [M, H]

        # output projection + residual + LayerNorm (fused epilogue)
        attn_out = jnp.dot(ctx, wo, preferred_element_type=jnp.float32) + bo
        x = _layer_norm(x + attn_out, aln_g, aln_b)

        # FFN + residual + LayerNorm
        h1 = _gelu(jnp.dot(x, w1, preferred_element_type=jnp.float32) + b1)
        ffn_out = jnp.dot(h1, w2, preferred_element_type=jnp.float32) + b2
        x = _layer_norm(x + ffn_out, fln_g, fln_b)

    # ---- LM head: logits [M, V] never leave VMEM (softmax / CE fused epilogue)
    logits = jnp.dot(x, w_out, preferred_element_type=jnp.float32) + b_out

    if mode == "probs":
        out_ref[...] = _softmax_rows(logits).astype(out_ref.dtype)
    else:
        # mean cross-entropy over rows with label != 0 (ignore_index=0)
        m = jnp.max(logits, axis=-1, keepdims=True)
        lse = jnp.log(jnp.sum(jnp.exp(logits - m), axis=-1, keepdims=True)) + m
        logp = logits - lse
        iota_l = jax.lax.broadcasted_iota(jnp.int32, logits.shape, 1)
        onehot_l = (iota_l == labels).astype(jnp.float32)
        nll = -jnp.sum(onehot_l * logp, axis=-1, keepdims=True)       # [M, 1]
        valid = (labels != 0).astype(jnp.float32)                     # [M, 1]
        nvalid = jnp.sum(valid)
        # guard against an all-ignored batch (would be 0/0 otherwise)
        out_ref[0, 0] = jnp.sum(nll * valid) / jnp.maximum(nvalid, 1.0)


# ------------------------------ model (glue) -------------------------------- #

class Config:
    vocab = 256
    hidden = 32
    layers = 2
    heads = 2
    intermediate = 64
    max_pos = 64


def init_params(key, cfg):
    keys = iter(jax.random.split(key, 64))

    def nrm(shape):
        return (0.02 * jax.random.normal(next(keys), shape)).astype(jnp.float32)

    H, I, V = cfg.hidden, cfg.intermediate, cfg.vocab
    params = {
        "word_emb": nrm((V, H)),
        "pos_emb": nrm((cfg.max_pos, H)),
        "type_emb": nrm((2, H)),
        "emb_ln_g": jnp.ones((H,), jnp.float32),
        "emb_ln_b": jnp.zeros((H,), jnp.float32),
        "w_out": nrm((H, V)),
        "b_out": jnp.zeros((V,), jnp.float32),
        "layers": [],
    }
    for _ in range(cfg.layers):
        params["layers"].append({
            # Q, K, V weights pre-concatenated -> single [H, 3H] matmul in-kernel
            "wqkv": nrm((H, 3 * H)), "bqkv": jnp.zeros((3 * H,), jnp.float32),
            "wo": nrm((H, H)), "bo": jnp.zeros((H,), jnp.float32),
            "attn_ln_g": jnp.ones((H,), jnp.float32),
            "attn_ln_b": jnp.zeros((H,), jnp.float32),
            "w1": nrm((H, I)), "b1": jnp.zeros((I,), jnp.float32),
            "w2": nrm((I, H)), "b2": jnp.zeros((H,), jnp.float32),
            "ffn_ln_g": jnp.ones((H,), jnp.float32),
            "ffn_ln_b": jnp.zeros((H,), jnp.float32),
        })
    return params


def title2content_forward(params, cfg, input_ids, attention_mask=None, labels=None):
    B, S = input_ids.shape
    if attention_mask is None:
        attention_mask = jnp.ones((B, S), dtype=jnp.int32)
    M = B * S
    H, V, I = cfg.hidden, cfg.vocab, cfg.intermediate
    NH = cfg.heads
    Dh = H // NH

    inputs = [
        input_ids.reshape(M, 1).astype(jnp.int32),
        attention_mask.astype(jnp.float32),
        params["word_emb"],
        params["pos_emb"][:S] + params["type_emb"][0][None, :],
        params["emb_ln_g"].reshape(1, H),
        params["emb_ln_b"].reshape(1, H),
    ]
    for layer in params["layers"]:
        inputs += [
            layer["wqkv"], layer["bqkv"].reshape(1, 3 * H),
            layer["wo"], layer["bo"].reshape(1, H),
            layer["attn_ln_g"].reshape(1, H), layer["attn_ln_b"].reshape(1, H),
            layer["w1"], layer["b1"].reshape(1, I),
            layer["w2"], layer["b2"].reshape(1, H),
            layer["ffn_ln_g"].reshape(1, H), layer["ffn_ln_b"].reshape(1, H),
        ]
    inputs += [params["w_out"], params["b_out"].reshape(1, V)]

    mode = "loss" if labels is not None else "probs"
    if mode == "loss":
        inputs.append(labels.reshape(M, 1).astype(jnp.int32))
        out_shape = jax.ShapeDtypeStruct((1, 1), jnp.float32)
    else:
        out_shape = jax.ShapeDtypeStruct((M, V), jnp.float32)

    kernel = functools.partial(
        _fused_forward_kernel,
        num_layers=cfg.layers, B=B, S=S, NH=NH, Dh=Dh, H=H, mode=mode)

    # Single pallas_call: no grid, every input/weight fully VMEM-resident.
    out = pl.pallas_call(kernel, out_shape=out_shape)(*inputs)

    if mode == "loss":
        return out[0, 0]
    return out.reshape(B, S, V)
    # TODO(synk): pretrained-checkpoint loading and param freezing (requires_grad)
    # are training/IO concerns with no kernel equivalent; weights are synthetic.


# ---------------------------------- main ------------------------------------ #

if __name__ == "__main__":
    cfg = Config()
    key = jax.random.PRNGKey(0)
    pkey, ikey = jax.random.split(key)
    params = init_params(pkey, cfg)

    B, S = 2, 8
    input_ids = jax.random.randint(ikey, (B, S), 1, cfg.vocab, dtype=jnp.int32)
    attention_mask = jnp.ones((B, S), dtype=jnp.int32).at[1, 6:].set(0)

    # inference path (labels=None) -> softmax probabilities
    probs = title2content_forward(params, cfg, input_ids, attention_mask)
    # training path -> cross-entropy loss with ignore_index=0
    labels = input_ids.at[:, 0].set(0)
    loss = title2content_forward(params, cfg, input_ids, attention_mask, labels=labels)

    jax.block_until_ready(probs)
    jax.block_until_ready(loss)
    assert probs.shape == (B, S, cfg.vocab)
    assert loss.shape == ()
    assert bool(jnp.isfinite(loss))
    print("KERNEL_OK")
</pallas_src>

<mosaic_0001>
module attributes {stable_mosaic.version = 11 : i64} {
  func.func @_fused_forward_kernel(%arg0: memref<16x1xi32, #tpu.memory_space<vmem>>, %arg1: memref<2x8xf32, #tpu.memory_space<vmem>>, %arg2: memref<256x32xf32, #tpu.memory_space<vmem>>, %arg3: memref<8x32xf32, #tpu.memory_space<vmem>>, %arg4: memref<1x32xf32, #tpu.memory_space<vmem>>, %arg5: memref<1x32xf32, #tpu.memory_space<vmem>>, %arg6: memref<32x96xf32, #tpu.memory_space<vmem>>, %arg7: memref<1x96xf32, #tpu.memory_space<vmem>>, %arg8: memref<32x32xf32, #tpu.memory_space<vmem>>, %arg9: memref<1x32xf32, #tpu.memory_space<vmem>>, %arg10: memref<1x32xf32, #tpu.memory_space<vmem>>, %arg11: memref<1x32xf32, #tpu.memory_space<vmem>>, %arg12: memref<32x64xf32, #tpu.memory_space<vmem>>, %arg13: memref<1x64xf32, #tpu.memory_space<vmem>>, %arg14: memref<64x32xf32, #tpu.memory_space<vmem>>, %arg15: memref<1x32xf32, #tpu.memory_space<vmem>>, %arg16: memref<1x32xf32, #tpu.memory_space<vmem>>, %arg17: memref<1x32xf32, #tpu.memory_space<vmem>>, %arg18: memref<32x96xf32, #tpu.memory_space<vmem>>, %arg19: memref<1x96xf32, #tpu.memory_space<vmem>>, %arg20: memref<32x32xf32, #tpu.memory_space<vmem>>, %arg21: memref<1x32xf32, #tpu.memory_space<vmem>>, %arg22: memref<1x32xf32, #tpu.memory_space<vmem>>, %arg23: memref<1x32xf32, #tpu.memory_space<vmem>>, %arg24: memref<32x64xf32, #tpu.memory_space<vmem>>, %arg25: memref<1x64xf32, #tpu.memory_space<vmem>>, %arg26: memref<64x32xf32, #tpu.memory_space<vmem>>, %arg27: memref<1x32xf32, #tpu.memory_space<vmem>>, %arg28: memref<1x32xf32, #tpu.memory_space<vmem>>, %arg29: memref<1x32xf32, #tpu.memory_space<vmem>>, %arg30: memref<32x256xf32, #tpu.memory_space<vmem>>, %arg31: memref<1x256xf32, #tpu.memory_space<vmem>>, %arg32: memref<16x256xf32, #tpu.memory_space<vmem>>) attributes {dimension_semantics = [], scalar_prefetch = 0 : i64, scratch_operands = 0 : i64, tpu.core_type = #tpu.core_type<tc>} {
    %c0 = arith.constant 0 : index
    %c0_0 = arith.constant 0 : index
    %0 = vector.load %arg0[%c0, %c0_0] : memref<16x1xi32, #tpu.memory_space<vmem>>, vector<16x1xi32>
    %c0_1 = arith.constant 0 : index
    %c0_2 = arith.constant 0 : index
    %1 = vector.load %arg1[%c0_1, %c0_2] : memref<2x8xf32, #tpu.memory_space<vmem>>, vector<2x8xf32>
    %c0_3 = arith.constant 0 : index
    %c0_4 = arith.constant 0 : index
    %2 = vector.load %arg2[%c0_3, %c0_4] : memref<256x32xf32, #tpu.memory_space<vmem>>, vector<256x32xf32>
    %c0_5 = arith.constant 0 : index
    %c0_6 = arith.constant 0 : index
    %3 = vector.load %arg3[%c0_5, %c0_6] : memref<8x32xf32, #tpu.memory_space<vmem>>, vector<8x32xf32>
    %c0_7 = arith.constant 0 : index
    %c0_8 = arith.constant 0 : index
    %4 = vector.load %arg4[%c0_7, %c0_8] : memref<1x32xf32, #tpu.memory_space<vmem>>, vector<1x32xf32>
    %c0_9 = arith.constant 0 : index
    %c0_10 = arith.constant 0 : index
    %5 = vector.load %arg5[%c0_9, %c0_10] : memref<1x32xf32, #tpu.memory_space<vmem>>, vector<1x32xf32>
    %c0_11 = arith.constant 0 : index
    %c0_12 = arith.constant 0 : index
    %6 = vector.load %arg6[%c0_11, %c0_12] : memref<32x96xf32, #tpu.memory_space<vmem>>, vector<32x96xf32>
    %c0_13 = arith.constant 0 : index
    %c0_14 = arith.constant 0 : index
    %7 = vector.load %arg7[%c0_13, %c0_14] : memref<1x96xf32, #tpu.memory_space<vmem>>, vector<1x96xf32>
    %c0_15 = arith.constant 0 : index
    %c0_16 = arith.constant 0 : index
    %8 = vector.load %arg8[%c0_15, %c0_16] : memref<32x32xf32, #tpu.memory_space<vmem>>, vector<32x32xf32>
    %c0_17 = arith.constant 0 : index
    %c0_18 = arith.constant 0 : index
    %9 = vector.load %arg9[%c0_17, %c0_18] : memref<1x32xf32, #tpu.memory_space<vmem>>, vector<1x32xf32>
    %c0_19 = arith.constant 0 : index
    %c0_20 = arith.constant 0 : index
    %10 = vector.load %arg10[%c0_19, %c0_20] : memref<1x32xf32, #tpu.memory_space<vmem>>, vector<1x32xf32>
    %c0_21 = arith.constant 0 : index
    %c0_22 = arith.constant 0 : index
    %11 = vector.load %arg11[%c0_21, %c0_22] : memref<1x32xf32, #tpu.memory_space<vmem>>, vector<1x32xf32>
    %c0_23 = arith.constant 0 : index
    %c0_24 = arith.constant 0 : index
    %12 = vector.load %arg12[%c0_23, %c0_24] : memref<32x64xf32, #tpu.memory_space<vmem>>, vector<32x64xf32>
    %c0_25 = arith.constant 0 : index
    %c0_26 = arith.constant 0 : index
    %13 = vector.load %arg13[%c0_25, %c0_26] : memref<1x64xf32, #tpu.memory_space<vmem>>, vector<1x64xf32>
    %c0_27 = arith.constant 0 : index
    %c0_28 = arith.constant 0 : index
    %14 = vector.load %arg14[%c0_27, %c0_28] : memref<64x32xf32, #tpu.memory_space<vmem>>, vector<64x32xf32>
    %c0_29 = arith.constant 0 : index
    %c0_30 = arith.constant 0 : index
    %15 = vector.load %arg15[%c0_29, %c0_30] : memref<1x32xf32, #tpu.memory_space<vmem>>, vector<1x32xf32>
    %c0_31 = arith.constant 0 : index
    %c0_32 = arith.constant 0 : index
    %16 = vector.load %arg16[%c0_31, %c0_32] : memref<1x32xf32, #tpu.memory_space<vmem>>, vector<1x32xf32>
    %c0_33 = arith.constant 0 : index
    %c0_34 = arith.constant 0 : index
    %17 = vector.load %arg17[%c0_33, %c0_34] : memref<1x32xf32, #tpu.memory_space<vmem>>, vector<1x32xf32>
    %c0_35 = arith.constant 0 : index
    %c0_36 = arith.constant 0 : index
    %18 = vector.load %arg18[%c0_35, %c0_36] : memref<32x96xf32, #tpu.memory_space<vmem>>, vector<32x96xf32>
    %c0_37 = arith.constant 0 : index
    %c0_38 = arith.constant 0 : index
    %19 = vector.load %arg19[%c0_37, %c0_38] : memref<1x96xf32, #tpu.memory_space<vmem>>, vector<1x96xf32>
    %c0_39 = arith.constant 0 : index
    %c0_40 = arith.constant 0 : index
    %20 = vector.load %arg20[%c0_39, %c0_40] : memref<32x32xf32, #tpu.memory_space<vmem>>, vector<32x32xf32>
    %c0_41 = arith.constant 0 : index
    %c0_42 = arith.constant 0 : index
    %21 = vector.load %arg21[%c0_41, %c0_42] : memref<1x32xf32, #tpu.memory_space<vmem>>, vector<1x32xf32>
    %c0_43 = arith.constant 0 : index
    %c0_44 = arith.constant 0 : index
    %22 = vector.load %arg22[%c0_43, %c0_44] : memref<1x32xf32, #tpu.memory_space<vmem>>, vector<1x32xf32>
    %c0_45 = arith.constant 0 : index
    %c0_46 = arith.constant 0 : index
    %23 = vector.load %arg23[%c0_45, %c0_46] : memref<1x32xf32, #tpu.memory_space<vmem>>, vector<1x32xf32>
    %c0_47 = arith.constant 0 : index
    %c0_48 = arith.constant 0 : index
    %24 = vector.load %arg24[%c0_47, %c0_48] : memref<32x64xf32, #tpu.memory_space<vmem>>, vector<32x64xf32>
    %c0_49 = arith.constant 0 : index
    %c0_50 = arith.constant 0 : index
    %25 = vector.load %arg25[%c0_49, %c0_50] : memref<1x64xf32, #tpu.memory_space<vmem>>, vector<1x64xf32>
    %c0_51 = arith.constant 0 : index
    %c0_52 = arith.constant 0 : index
    %26 = vector.load %arg26[%c0_51, %c0_52] : memref<64x32xf32, #tpu.memory_space<vmem>>, vector<64x32xf32>
    %c0_53 = arith.constant 0 : index
    %c0_54 = arith.constant 0 : index
    %27 = vector.load %arg27[%c0_53, %c0_54] : memref<1x32xf32, #tpu.memory_space<vmem>>, vector<1x32xf32>
    %c0_55 = arith.constant 0 : index
    %c0_56 = arith.constant 0 : index
    %28 = vector.load %arg28[%c0_55, %c0_56] : memref<1x32xf32, #tpu.memory_space<vmem>>, vector<1x32xf32>
    %c0_57 = arith.constant 0 : index
    %c0_58 = arith.constant 0 : index
    %29 = vector.load %arg29[%c0_57, %c0_58] : memref<1x32xf32, #tpu.memory_space<vmem>>, vector<1x32xf32>
    %c0_59 = arith.constant 0 : index
    %c0_60 = arith.constant 0 : index
    %30 = vector.load %arg30[%c0_59, %c0_60] : memref<32x256xf32, #tpu.memory_space<vmem>>, vector<32x256xf32>
    %c0_61 = arith.constant 0 : index
    %c0_62 = arith.constant 0 : index
    %31 = vector.load %arg31[%c0_61, %c0_62] : memref<1x256xf32, #tpu.memory_space<vmem>>, vector<1x256xf32>
    %32 = tpu.iota {dimensions = array<i32: 1>} : vector<16x256xi32>
    %33 = vector.broadcast %0 : vector<16x1xi32> to vector<16x256xi32>
    %34 = arith.cmpi eq, %32, %33 : vector<16x256xi32>
    %35 = arith.extui %34 : vector<16x256xi1> to vector<16x256xi32>
    %36 = arith.sitofp %35 : vector<16x256xi32> to vector<16x256xf32>
    %cst = arith.constant dense<0.000000e+00> : vector<16x32xf32>
    %37 = tpu.matmul %36, %2, %cst {dimension_numbers = #tpu.dot_dimension_numbers<[1], [0], [0], [1], [0, 0, 1, 1], [], []>} : vector<16x256xf32>, vector<256x32xf32>, vector<16x32xf32> -> vector<16x32xf32>
    %38 = tpu.concatenate %3, %3 in 0 : vector<8x32xf32>, vector<8x32xf32> -> vector<16x32xf32>
    %39 = arith.addf %37, %38 : vector<16x32xf32>
    %cst_63 = arith.constant dense<0.000000e+00> : vector<16xf32>
    %40 = vector.multi_reduction <add>, %39, %cst_63 [1] : vector<16x32xf32> to vector<16xf32>
    %41 = vector.shape_cast %40 : vector<16xf32> to vector<16x1xf32>
    %cst_64 = arith.constant 3.200000e+01 : f32
    %42 = vector.broadcast %cst_64 : f32 to vector<16x1xf32>
    %43 = arith.divf %41, %42 : vector<16x1xf32>
    %44 = vector.broadcast %43 : vector<16x1xf32> to vector<16x32xf32>
    %45 = arith.subf %39, %44 : vector<16x32xf32>
    %46 = arith.mulf %45, %45 : vector<16x32xf32>
    %cst_65 = arith.constant dense<0.000000e+00> : vector<16xf32>
    %47 = vector.multi_reduction <add>, %46, %cst_65 [1] : vector<16x32xf32> to vector<16xf32>
    %48 = vector.shape_cast %47 : vector<16xf32> to vector<16x1xf32>
    %cst_66 = arith.constant 3.200000e+01 : f32
    %49 = vector.broadcast %cst_66 : f32 to vector<16x1xf32>
    %50 = arith.divf %48, %49 : vector<16x1xf32>
    %51 = vector.broadcast %43 : vector<16x1xf32> to vector<16x32xf32>
    %52 = arith.subf %39, %51 : vector<16x32xf32>
    %cst_67 = arith.constant 9.99999996E-13 : f32
    %53 = vector.broadcast %cst_67 : f32 to vector<16x1xf32>
    %54 = arith.addf %50, %53 : vector<16x1xf32>
    %55 = math.rsqrt %54 : vector<16x1xf32>
    %56 = vector.broadcast %55 : vector<16x1xf32> to vector<16x32xf32>
    %57 = arith.mulf %52, %56 : vector<16x32xf32>
    %58 = vector.broadcast %4 : vector<1x32xf32> to vector<16x32xf32>
    %59 = arith.mulf %57, %58 : vector<16x32xf32>
    %60 = vector.broadcast %5 : vector<1x32xf32> to vector<16x32xf32>
    %61 = arith.addf %59, %60 : vector<16x32xf32>
    %cst_68 = arith.constant 1.000000e+00 : f32
    %62 = vector.broadcast %cst_68 : f32 to vector<2x8xf32>
    %63 = arith.subf %62, %1 : vector<2x8xf32>
    %cst_69 = arith.constant -1.000000e+09 : f32
    %64 = vector.broadcast %cst_69 : f32 to vector<2x8xf32>
    %65 = arith.mulf %63, %64 : vector<2x8xf32>
    %cst_70 = arith.constant dense<0.000000e+00> : vector<16x96xf32>
    %66 = tpu.matmul %61, %6, %cst_70 {dimension_numbers = #tpu.dot_dimension_numbers<[1], [0], [0], [1], [0, 0, 1, 1], [], []>} : vector<16x32xf32>, vector<32x96xf32>, vector<16x96xf32> -> vector<16x96xf32>
    %67 = vector.broadcast %7 : vector<1x96xf32> to vector<16x96xf32>
    %68 = arith.addf %66, %67 : vector<16x96xf32>
    %69 = vector.extract_strided_slice %68 {offsets = [0, 0], sizes = [16, 32], strides = [1, 1]} : vector<16x96xf32> to vector<16x32xf32>
    %70 = vector.extract_strided_slice %68 {offsets = [0, 32], sizes = [16, 32], strides = [1, 1]} : vector<16x96xf32> to vector<16x32xf32>
    %71 = vector.extract_strided_slice %68 {offsets = [0, 64], sizes = [16, 32], strides = [1, 1]} : vector<16x96xf32> to vector<16x32xf32>
    %72 = vector.extract_strided_slice %65 {offsets = [0, 0], sizes = [1, 8], strides = [1, 1]} : vector<2x8xf32> to vector<1x8xf32>
    %73 = vector.extract_strided_slice %69 {offsets = [0, 0], sizes = [8, 16], strides = [1, 1]} : vector<16x32xf32> to vector<8x16xf32>
    %74 = vector.extract_strided_slice %70 {offsets = [0, 0], sizes = [8, 16], strides = [1, 1]} : vector<16x32xf32> to vector<8x16xf32>
    %75 = vector.extract_strided_slice %71 {offsets = [0, 0], sizes = [8, 16], strides = [1, 1]} : vector<16x32xf32> to vector<8x16xf32>
    %cst_71 = arith.constant dense<0.000000e+00> : vector<8x8xf32>
    %76 = tpu.matmul %73, %74, %cst_71 {dimension_numbers = #tpu.dot_dimension_numbers<[1], [1], [0], [0], [0, 0, 1, 0], [], []>} : vector<8x16xf32>, vector<8x16xf32>, vector<8x8xf32> -> vector<8x8xf32>
    %cst_72 = arith.constant 2.500000e-01 : f32
    %77 = vector.broadcast %cst_72 : f32 to vector<8x8xf32>
    %78 = arith.mulf %76, %77 : vector<8x8xf32>
    %79 = vector.broadcast %72 : vector<1x8xf32> to vector<8x8xf32>
    %80 = arith.addf %78, %79 : vector<8x8xf32>
    %cst_73 = arith.constant dense<0xFF800000> : vector<8xf32>
    %81 = vector.multi_reduction <maximumf>, %80, %cst_73 [1] : vector<8x8xf32> to vector<8xf32>
    %82 = vector.shape_cast %81 : vector<8xf32> to vector<8x1xf32>
    %83 = vector.broadcast %82 : vector<8x1xf32> to vector<8x8xf32>
    %84 = arith.subf %80, %83 : vector<8x8xf32>
    %85 = math.exp %84 : vector<8x8xf32>
    %cst_74 = arith.constant dense<0.000000e+00> : vector<8xf32>
    %86 = vector.multi_reduction <add>, %85, %cst_74 [1] : vector<8x8xf32> to vector<8xf32>
    %87 = vector.shape_cast %86 : vector<8xf32> to vector<8x1xf32>
    %88 = tpu.reciprocal %87 {approx = true} : vector<8x1xf32> -> vector<8x1xf32>
    %89 = vector.broadcast %88 : vector<8x1xf32> to vector<8x8xf32>
    %90 = arith.mulf %85, %89 : vector<8x8xf32>
    %cst_75 = arith.constant dense<0.000000e+00> : vector<8x16xf32>
    %91 = tpu.matmul %90, %75, %cst_75 {dimension_numbers = #tpu.dot_dimension_numbers<[1], [0], [0], [1], [0, 0, 1, 1], [], []>} : vector<8x8xf32>, vector<8x16xf32>, vector<8x16xf32> -> vector<8x16xf32>
    %92 = vector.extract_strided_slice %69 {offsets = [0, 16], sizes = [8, 16], strides = [1, 1]} : vector<16x32xf32> to vector<8x16xf32>
    %93 = vector.extract_strided_slice %70 {offsets = [0, 16], sizes = [8, 16], strides = [1, 1]} : vector<16x32xf32> to vector<8x16xf32>
    %94 = vector.extract_strided_slice %71 {offsets = [0, 16], sizes = [8, 16], strides = [1, 1]} : vector<16x32xf32> to vector<8x16xf32>
    %cst_76 = arith.constant dense<0.000000e+00> : vector<8x8xf32>
    %95 = tpu.matmul %92, %93, %cst_76 {dimension_numbers = #tpu.dot_dimension_numbers<[1], [1], [0], [0], [0, 0, 1, 0], [], []>} : vector<8x16xf32>, vector<8x16xf32>, vector<8x8xf32> -> vector<8x8xf32>
    %cst_77 = arith.constant 2.500000e-01 : f32
    %96 = vector.broadcast %cst_77 : f32 to vector<8x8xf32>
    %97 = arith.mulf %95, %96 : vector<8x8xf32>
    %98 = vector.broadcast %72 : vector<1x8xf32> to vector<8x8xf32>
    %99 = arith.addf %97, %98 : vector<8x8xf32>
    %cst_78 = arith.constant dense<0xFF800000> : vector<8xf32>
    %100 = vector.multi_reduction <maximumf>, %99, %cst_78 [1] : vector<8x8xf32> to vector<8xf32>
    %101 = vector.shape_cast %100 : vector<8xf32> to vector<8x1xf32>
    %102 = vector.broadcast %101 : vector<8x1xf32> to vector<8x8xf32>
    %103 = arith.subf %99, %102 : vector<8x8xf32>
    %104 = math.exp %103 : vector<8x8xf32>
    %cst_79 = arith.constant dense<0.000000e+00> : vector<8xf32>
    %105 = vector.multi_reduction <add>, %104, %cst_79 [1] : vector<8x8xf32> to vector<8xf32>
    %106 = vector.shape_cast %105 : vector<8xf32> to vector<8x1xf32>
    %107 = tpu.reciprocal %106 {approx = true} : vector<8x1xf32> -> vector<8x1xf32>
    %108 = vector.broadcast %107 : vector<8x1xf32> to vector<8x8xf32>
    %109 = arith.mulf %104, %108 : vector<8x8xf32>
    %cst_80 = arith.constant dense<0.000000e+00> : vector<8x16xf32>
    %110 = tpu.matmul %109, %94, %cst_80 {dimension_numbers = #tpu.dot_dimension_numbers<[1], [0], [0], [1], [0, 0, 1, 1], [], []>} : vector<8x8xf32>, vector<8x16xf32>, vector<8x16xf32> -> vector<8x16xf32>
    %111 = tpu.concatenate %91, %110 in 1 : vector<8x16xf32>, vector<8x16xf32> -> vector<8x32xf32>
    %112 = vector.extract_strided_slice %65 {offsets = [1, 0], sizes = [1, 8], strides = [1, 1]} : vector<2x8xf32> to vector<1x8xf32>
    %113 = vector.extract_strided_slice %69 {offsets = [8, 0], sizes = [8, 16], strides = [1, 1]} : vector<16x32xf32> to vector<8x16xf32>
    %114 = vector.extract_strided_slice %70 {offsets = [8, 0], sizes = [8, 16], strides = [1, 1]} : vector<16x32xf32> to vector<8x16xf32>
    %115 = vector.extract_strided_slice %71 {offsets = [8, 0], sizes = [8, 16], strides = [1, 1]} : vector<16x32xf32> to vector<8x16xf32>
    %cst_81 = arith.constant dense<0.000000e+00> : vector<8x8xf32>
    %116 = tpu.matmul %113, %114, %cst_81 {dimension_numbers = #tpu.dot_dimension_numbers<[1], [1], [0], [0], [0, 0, 1, 0], [], []>} : vector<8x16xf32>, vector<8x16xf32>, vector<8x8xf32> -> vector<8x8xf32>
    %cst_82 = arith.constant 2.500000e-01 : f32
    %117 = vector.broadcast %cst_82 : f32 to vector<8x8xf32>
    %118 = arith.mulf %116, %117 : vector<8x8xf32>
    %119 = vector.broadcast %112 : vector<1x8xf32> to vector<8x8xf32>
    %120 = arith.addf %118, %119 : vector<8x8xf32>
    %cst_83 = arith.constant dense<0xFF800000> : vector<8xf32>
    %121 = vector.multi_reduction <maximumf>, %120, %cst_83 [1] : vector<8x8xf32> to vector<8xf32>
    %122 = vector.shape_cast %121 : vector<8xf32> to vector<8x1xf32>
    %123 = vector.broadcast %122 : vector<8x1xf32> to vector<8x8xf32>
    %124 = arith.subf %120, %123 : vector<8x8xf32>
    %125 = math.exp %124 : vector<8x8xf32>
    %cst_84 = arith.constant dense<0.000000e+00> : vector<8xf32>
    %126 = vector.multi_reduction <add>, %125, %cst_84 [1] : vector<8x8xf32> to vector<8xf32>
    %127 = vector.shape_cast %126 : vector<8xf32> to vector<8x1xf32>
    %128 = tpu.reciprocal %127 {approx = true} : vector<8x1xf32> -> vector<8x1xf32>
    %129 = vector.broadcast %128 : vector<8x1xf32> to vector<8x8xf32>
    %130 = arith.mulf %125, %129 : vector<8x8xf32>
    %cst_85 = arith.constant dense<0.000000e+00> : vector<8x16xf32>
    %131 = tpu.matmul %130, %115, %cst_85 {dimension_numbers = #tpu.dot_dimension_numbers<[1], [0], [0], [1], [0, 0, 1, 1], [], []>} : vector<8x8xf32>, vector<8x16xf32>, vector<8x16xf32> -> vector<8x16xf32>
    %132 = vector.extract_strided_slice %69 {offsets = [8, 16], sizes = [8, 16], strides = [1, 1]} : vector<16x32xf32> to vector<8x16xf32>
    %133 = vector.extract_strided_slice %70 {offsets = [8, 16], sizes = [8, 16], strides = [1, 1]} : vector<16x32xf32> to vector<8x16xf32>
    %134 = vector.extract_strided_slice %71 {offsets = [8, 16], sizes = [8, 16], strides = [1, 1]} : vector<16x32xf32> to vector<8x16xf32>
    %cst_86 = arith.constant dense<0.000000e+00> : vector<8x8xf32>
    %135 = tpu.matmul %132, %133, %cst_86 {dimension_numbers = #tpu.dot_dimension_numbers<[1], [1], [0], [0], [0, 0, 1, 0], [], []>} : vector<8x16xf32>, vector<8x16xf32>, vector<8x8xf32> -> vector<8x8xf32>
    %cst_87 = arith.constant 2.500000e-01 : f32
    %136 = vector.broadcast %cst_87 : f32 to vector<8x8xf32>
    %137 = arith.mulf %135, %136 : vector<8x8xf32>
    %138 = vector.broadcast %112 : vector<1x8xf32> to vector<8x8xf32>
    %139 = arith.addf %137, %138 : vector<8x8xf32>
    %cst_88 = arith.constant dense<0xFF800000> : vector<8xf32>
    %140 = vector.multi_reduction <maximumf>, %139, %cst_88 [1] : vector<8x8xf32> to vector<8xf32>
    %141 = vector.shape_cast %140 : vector<8xf32> to vector<8x1xf32>
    %142 = vector.broadcast %141 : vector<8x1xf32> to vector<8x8xf32>
    %143 = arith.subf %139, %142 : vector<8x8xf32>
    %144 = math.exp %143 : vector<8x8xf32>
    %cst_89 = arith.constant dense<0.000000e+00> : vector<8xf32>
    %145 = vector.multi_reduction <add>, %144, %cst_89 [1] : vector<8x8xf32> to vector<8xf32>
    %146 = vector.shape_cast %145 : vector<8xf32> to vector<8x1xf32>
    %147 = tpu.reciprocal %146 {approx = true} : vector<8x1xf32> -> vector<8x1xf32>
    %148 = vector.broadcast %147 : vector<8x1xf32> to vector<8x8xf32>
    %149 = arith.mulf %144, %148 : vector<8x8xf32>
    %cst_90 = arith.constant dense<0.000000e+00> : vector<8x16xf32>
    %150 = tpu.matmul %149, %134, %cst_90 {dimension_numbers = #tpu.dot_dimension_numbers<[1], [0], [0], [1], [0, 0, 1, 1], [], []>} : vector<8x8xf32>, vector<8x16xf32>, vector<8x16xf32> -> vector<8x16xf32>
    %151 = tpu.concatenate %131, %150 in 1 : vector<8x16xf32>, vector<8x16xf32> -> vector<8x32xf32>
    %152 = tpu.concatenate %111, %151 in 0 : vector<8x32xf32>, vector<8x32xf32> -> vector<16x32xf32>
    %cst_91 = arith.constant dense<0.000000e+00> : vector<16x32xf32>
    %153 = tpu.matmul %152, %8, %cst_91 {dimension_numbers = #tpu.dot_dimension_numbers<[1], [0], [0], [1], [0, 0, 1, 1], [], []>} : vector<16x32xf32>, vector<32x32xf32>, vector<16x32xf32> -> vector<16x32xf32>
    %154 = vector.broadcast %9 : vector<1x32xf32> to vector<16x32xf32>
    %155 = arith.addf %153, %154 : vector<16x32xf32>
    %156 = arith.addf %61, %155 : vector<16x32xf32>
    %cst_92 = arith.constant dense<0.000000e+00> : vector<16xf32>
    %157 = vector.multi_reduction <add>, %156, %cst_92 [1] : vector<16x32xf32> to vector<16xf32>
    %158 = vector.shape_cast %157 : vector<16xf32> to vector<16x1xf32>
    %cst_93 = arith.constant 3.200000e+01 : f32
    %159 = vector.broadcast %cst_93 : f32 to vector<16x1xf32>
    %160 = arith.divf %158, %159 : vector<16x1xf32>
    %161 = vector.broadcast %160 : vector<16x1xf32> to vector<16x32xf32>
    %162 = arith.subf %156, %161 : vector<16x32xf32>
    %163 = arith.mulf %162, %162 : vector<16x32xf32>
    %cst_94 = arith.constant dense<0.000000e+00> : vector<16xf32>
    %164 = vector.multi_reduction <add>, %163, %cst_94 [1] : vector<16x32xf32> to vector<16xf32>
    %165 = vector.shape_cast %164 : vector<16xf32> to vector<16x1xf32>
    %cst_95 = arith.constant 3.200000e+01 : f32
    %166 = vector.broadcast %cst_95 : f32 to vector<16x1xf32>
    %167 = arith.divf %165, %166 : vector<16x1xf32>
    %168 = vector.broadcast %160 : vector<16x1xf32> to vector<16x32xf32>
    %169 = arith.subf %156, %168 : vector<16x32xf32>
    %cst_96 = arith.constant 9.99999996E-13 : f32
    %170 = vector.broadcast %cst_96 : f32 to vector<16x1xf32>
    %171 = arith.addf %167, %170 : vector<16x1xf32>
    %172 = math.rsqrt %171 : vector<16x1xf32>
    %173 = vector.broadcast %172 : vector<16x1xf32> to vector<16x32xf32>
    %174 = arith.mulf %169, %173 : vector<16x32xf32>
    %175 = vector.broadcast %10 : vector<1x32xf32> to vector<16x32xf32>
    %176 = arith.mulf %174, %175 : vector<16x32xf32>
    %177 = vector.broadcast %11 : vector<1x32xf32> to vector<16x32xf32>
    %178 = arith.addf %176, %177 : vector<16x32xf32>
    %cst_97 = arith.constant dense<0.000000e+00> : vector<16x64xf32>
    %179 = tpu.matmul %178, %12, %cst_97 {dimension_numbers = #tpu.dot_dimension_numbers<[1], [0], [0], [1], [0, 0, 1, 1], [], []>} : vector<16x32xf32>, vector<32x64xf32>, vector<16x64xf32> -> vector<16x64xf32>
    %180 = vector.broadcast %13 : vector<1x64xf32> to vector<16x64xf32>
    %181 = arith.addf %179, %180 : vector<16x64xf32>
    %cst_98 = arith.constant 5.000000e-01 : f32
    %182 = vector.broadcast %cst_98 : f32 to vector<16x64xf32>
    %183 = arith.mulf %182, %181 : vector<16x64xf32>
    %cst_99 = arith.constant 4.471500e-02 : f32
    %184 = vector.broadcast %cst_99 : f32 to vector<16x64xf32>
    %185 = arith.mulf %184, %181 : vector<16x64xf32>
    %186 = arith.mulf %185, %181 : vector<16x64xf32>
    %187 = arith.mulf %186, %181 : vector<16x64xf32>
    %188 = arith.addf %181, %187 : vector<16x64xf32>
    %cst_100 = arith.constant 0.797884583 : f32
    %189 = vector.broadcast %cst_100 : f32 to vector<16x64xf32>
    %190 = arith.mulf %189, %188 : vector<16x64xf32>
    %191 = math.tanh %190 : vector<16x64xf32>
    %cst_101 = arith.constant 1.000000e+00 : f32
    %192 = vector.broadcast %cst_101 : f32 to vector<16x64xf32>
    %193 = arith.addf %192, %191 : vector<16x64xf32>
    %194 = arith.mulf %183, %193 : vector<16x64xf32>
    %cst_102 = arith.constant dense<0.000000e+00> : vector<16x32xf32>
    %195 = tpu.matmul %194, %14, %cst_102 {dimension_numbers = #tpu.dot_dimension_numbers<[1], [0], [0], [1], [0, 0, 1, 1], [], []>} : vector<16x64xf32>, vector<64x32xf32>, vector<16x32xf32> -> vector<16x32xf32>
    %196 = vector.broadcast %15 : vector<1x32xf32> to vector<16x32xf32>
    %197 = arith.addf %195, %196 : vector<16x32xf32>
    %198 = arith.addf %178, %197 : vector<16x32xf32>
    %cst_103 = arith.constant dense<0.000000e+00> : vector<16xf32>
    %199 = vector.multi_reduction <add>, %198, %cst_103 [1] : vector<16x32xf32> to vector<16xf32>
    %200 = vector.shape_cast %199 : vector<16xf32> to vector<16x1xf32>
    %cst_104 = arith.constant 3.200000e+01 : f32
    %201 = vector.broadcast %cst_104 : f32 to vector<16x1xf32>
    %202 = arith.divf %200, %201 : vector<16x1xf32>
    %203 = vector.broadcast %202 : vector<16x1xf32> to vector<16x32xf32>
    %204 = arith.subf %198, %203 : vector<16x32xf32>
    %205 = arith.mulf %204, %204 : vector<16x32xf32>
    %cst_105 = arith.constant dense<0.000000e+00> : vector<16xf32>
    %206 = vector.multi_reduction <add>, %205, %cst_105 [1] : vector<16x32xf32> to vector<16xf32>
    %207 = vector.shape_cast %206 : vector<16xf32> to vector<16x1xf32>
    %cst_106 = arith.constant 3.200000e+01 : f32
    %208 = vector.broadcast %cst_106 : f32 to vector<16x1xf32>
    %209 = arith.divf %207, %208 : vector<16x1xf32>
    %210 = vector.broadcast %202 : vector<16x1xf32> to vector<16x32xf32>
    %211 = arith.subf %198, %210 : vector<16x32xf32>
    %cst_107 = arith.constant 9.99999996E-13 : f32
    %212 = vector.broadcast %cst_107 : f32 to vector<16x1xf32>
    %213 = arith.addf %209, %212 : vector<16x1xf32>
    %214 = math.rsqrt %213 : vector<16x1xf32>
    %215 = vector.broadcast %214 : vector<16x1xf32> to vector<16x32xf32>
    %216 = arith.mulf %211, %215 : vector<16x32xf32>
    %217 = vector.broadcast %16 : vector<1x32xf32> to vector<16x32xf32>
    %218 = arith.mulf %216, %217 : vector<16x32xf32>
    %219 = vector.broadcast %17 : vector<1x32xf32> to vector<16x32xf32>
    %220 = arith.addf %218, %219 : vector<16x32xf32>
    %cst_108 = arith.constant dense<0.000000e+00> : vector<16x96xf32>
    %221 = tpu.matmul %220, %18, %cst_108 {dimension_numbers = #tpu.dot_dimension_numbers<[1], [0], [0], [1], [0, 0, 1, 1], [], []>} : vector<16x32xf32>, vector<32x96xf32>, vector<16x96xf32> -> vector<16x96xf32>
    %222 = vector.broadcast %19 : vector<1x96xf32> to vector<16x96xf32>
    %223 = arith.addf %221, %222 : vector<16x96xf32>
    %224 = vector.extract_strided_slice %223 {offsets = [0, 0], sizes = [16, 32], strides = [1, 1]} : vector<16x96xf32> to vector<16x32xf32>
    %225 = vector.extract_strided_slice %223 {offsets = [0, 32], sizes = [16, 32], strides = [1, 1]} : vector<16x96xf32> to vector<16x32xf32>
    %226 = vector.extract_strided_slice %223 {offsets = [0, 64], sizes = [16, 32], strides = [1, 1]} : vector<16x96xf32> to vector<16x32xf32>
    %227 = vector.extract_strided_slice %65 {offsets = [0, 0], sizes = [1, 8], strides = [1, 1]} : vector<2x8xf32> to vector<1x8xf32>
    %228 = vector.extract_strided_slice %224 {offsets = [0, 0], sizes = [8, 16], strides = [1, 1]} : vector<16x32xf32> to vector<8x16xf32>
    %229 = vector.extract_strided_slice %225 {offsets = [0, 0], sizes = [8, 16], strides = [1, 1]} : vector<16x32xf32> to vector<8x16xf32>
    %230 = vector.extract_strided_slice %226 {offsets = [0, 0], sizes = [8, 16], strides = [1, 1]} : vector<16x32xf32> to vector<8x16xf32>
    %cst_109 = arith.constant dense<0.000000e+00> : vector<8x8xf32>
    %231 = tpu.matmul %228, %229, %cst_109 {dimension_numbers = #tpu.dot_dimension_numbers<[1], [1], [0], [0], [0, 0, 1, 0], [], []>} : vector<8x16xf32>, vector<8x16xf32>, vector<8x8xf32> -> vector<8x8xf32>
    %cst_110 = arith.constant 2.500000e-01 : f32
    %232 = vector.broadcast %cst_110 : f32 to vector<8x8xf32>
    %233 = arith.mulf %231, %232 : vector<8x8xf32>
    %234 = vector.broadcast %227 : vector<1x8xf32> to vector<8x8xf32>
    %235 = arith.addf %233, %234 : vector<8x8xf32>
    %cst_111 = arith.constant dense<0xFF800000> : vector<8xf32>
    %236 = vector.multi_reduction <maximumf>, %235, %cst_111 [1] : vector<8x8xf32> to vector<8xf32>
    %237 = vector.shape_cast %236 : vector<8xf32> to vector<8x1xf32>
    %238 = vector.broadcast %237 : vector<8x1xf32> to vector<8x8xf32>
    %239 = arith.subf %235, %238 : vector<8x8xf32>
    %240 = math.exp %239 : vector<8x8xf32>
    %cst_112 = arith.constant dense<0.000000e+00> : vector<8xf32>
    %241 = vector.multi_reduction <add>, %240, %cst_112 [1] : vector<8x8xf32> to vector<8xf32>
    %242 = vector.shape_cast %241 : vector<8xf32> to vector<8x1xf32>
    %243 = tpu.reciprocal %242 {approx = true} : vector<8x1xf32> -> vector<8x1xf32>
    %244 = vector.broadcast %243 : vector<8x1xf32> to vector<8x8xf32>
    %245 = arith.mulf %240, %244 : vector<8x8xf32>
    %cst_113 = arith.constant dense<0.000000e+00> : vector<8x16xf32>
    %246 = tpu.matmul %245, %230, %cst_113 {dimension_numbers = #tpu.dot_dimension_numbers<[1], [0], [0], [1], [0, 0, 1, 1], [], []>} : vector<8x8xf32>, vector<8x16xf32>, vector<8x16xf32> -> vector<8x16xf32>
    %247 = vector.extract_strided_slice %224 {offsets = [0, 16], sizes = [8, 16], strides = [1, 1]} : vector<16x32xf32> to vector<8x16xf32>
    %248 = vector.extract_strided_slice %225 {offsets = [0, 16], sizes = [8, 16], strides = [1, 1]} : vector<16x32xf32> to vector<8x16xf32>
    %249 = vector.extract_strided_slice %226 {offsets = [0, 16], sizes = [8, 16], strides = [1, 1]} : vector<16x32xf32> to vector<8x16xf32>
    %cst_114 = arith.constant dense<0.000000e+00> : vector<8x8xf32>
    %250 = tpu.matmul %247, %248, %cst_114 {dimension_numbers = #tpu.dot_dimension_numbers<[1], [1], [0], [0], [0, 0, 1, 0], [], []>} : vector<8x16xf32>, vector<8x16xf32>, vector<8x8xf32> -> vector<8x8xf32>
    %cst_115 = arith.constant 2.500000e-01 : f32
    %251 = vector.broadcast %cst_115 : f32 to vector<8x8xf32>
    %252 = arith.mulf %250, %251 : vector<8x8xf32>
    %253 = vector.broadcast %227 : vector<1x8xf32> to vector<8x8xf32>
    %254 = arith.addf %252, %253 : vector<8x8xf32>
    %cst_116 = arith.constant dense<0xFF800000> : vector<8xf32>
    %255 = vector.multi_reduction <maximumf>, %254, %cst_116 [1] : vector<8x8xf32> to vector<8xf32>
    %256 = vector.shape_cast %255 : vector<8xf32> to vector<8x1xf32>
    %257 = vector.broadcast %256 : vector<8x1xf32> to vector<8x8xf32>
    %258 = arith.subf %254, %257 : vector<8x8xf32>
    %259 = math.exp %258 : vector<8x8xf32>
    %cst_117 = arith.constant dense<0.000000e+00> : vector<8xf32>
    %260 = vector.multi_reduction <add>, %259, %cst_117 [1] : vector<8x8xf32> to vector<8xf32>
    %261 = vector.shape_cast %260 : vector<8xf32> to vector<8x1xf32>
    %262 = tpu.reciprocal %261 {approx = true} : vector<8x1xf32> -> vector<8x1xf32>
    %263 = vector.broadcast %262 : vector<8x1xf32> to vector<8x8xf32>
    %264 = arith.mulf %259, %263 : vector<8x8xf32>
    %cst_118 = arith.constant dense<0.000000e+00> : vector<8x16xf32>
    %265 = tpu.matmul %264, %249, %cst_118 {dimension_numbers = #tpu.dot_dimension_numbers<[1], [0], [0], [1], [0, 0, 1, 1], [], []>} : vector<8x8xf32>, vector<8x16xf32>, vector<8x16xf32> -> vector<8x16xf32>
    %266 = tpu.concatenate %246, %265 in 1 : vector<8x16xf32>, vector<8x16xf32> -> vector<8x32xf32>
    %267 = vector.extract_strided_slice %65 {offsets = [1, 0], sizes = [1, 8], strides = [1, 1]} : vector<2x8xf32> to vector<1x8xf32>
    %268 = vector.extract_strided_slice %224 {offsets = [8, 0], sizes = [8, 16], strides = [1, 1]} : vector<16x32xf32> to vector<8x16xf32>
    %269 = vector.extract_strided_slice %225 {offsets = [8, 0], sizes = [8, 16], strides = [1, 1]} : vector<16x32xf32> to vector<8x16xf32>
    %270 = vector.extract_strided_slice %226 {offsets = [8, 0], sizes = [8, 16], strides = [1, 1]} : vector<16x32xf32> to vector<8x16xf32>
    %cst_119 = arith.constant dense<0.000000e+00> : vector<8x8xf32>
    %271 = tpu.matmul %268, %269, %cst_119 {dimension_numbers = #tpu.dot_dimension_numbers<[1], [1], [0], [0], [0, 0, 1, 0], [], []>} : vector<8x16xf32>, vector<8x16xf32>, vector<8x8xf32> -> vector<8x8xf32>
    %cst_120 = arith.constant 2.500000e-01 : f32
    %272 = vector.broadcast %cst_120 : f32 to vector<8x8xf32>
    %273 = arith.mulf %271, %272 : vector<8x8xf32>
    %274 = vector.broadcast %267 : vector<1x8xf32> to vector<8x8xf32>
    %275 = arith.addf %273, %274 : vector<8x8xf32>
    %cst_121 = arith.constant dense<0xFF800000> : vector<8xf32>
    %276 = vector.multi_reduction <maximumf>, %275, %cst_121 [1] : vector<8x8xf32> to vector<8xf32>
    %277 = vector.shape_cast %276 : vector<8xf32> to vector<8x1xf32>
    %278 = vector.broadcast %277 : vector<8x1xf32> to vector<8x8xf32>
    %279 = arith.subf %275, %278 : vector<8x8xf32>
    %280 = math.exp %279 : vector<8x8xf32>
    %cst_122 = arith.constant dense<0.000000e+00> : vector<8xf32>
    %281 = vector.multi_reduction <add>, %280, %cst_122 [1] : vector<8x8xf32> to vector<8xf32>
    %282 = vector.shape_cast %281 : vector<8xf32> to vector<8x1xf32>
    %283 = tpu.reciprocal %282 {approx = true} : vector<8x1xf32> -> vector<8x1xf32>
    %284 = vector.broadcast %283 : vector<8x1xf32> to vector<8x8xf32>
    %285 = arith.mulf %280, %284 : vector<8x8xf32>
    %cst_123 = arith.constant dense<0.000000e+00> : vector<8x16xf32>
    %286 = tpu.matmul %285, %270, %cst_123 {dimension_numbers = #tpu.dot_dimension_numbers<[1], [0], [0], [1], [0, 0, 1, 1], [], []>} : vector<8x8xf32>, vector<8x16xf32>, vector<8x16xf32> -> vector<8x16xf32>
    %287 = vector.extract_strided_slice %224 {offsets = [8, 16], sizes = [8, 16], strides = [1, 1]} : vector<16x32xf32> to vector<8x16xf32>
    %288 = vector.extract_strided_slice %225 {offsets = [8, 16], sizes = [8, 16], strides = [1, 1]} : vector<16x32xf32> to vector<8x16xf32>
    %289 = vector.extract_strided_slice %226 {offsets = [8, 16], sizes = [8, 16], strides = [1, 1]} : vector<16x32xf32> to vector<8x16xf32>
    %cst_124 = arith.constant dense<0.000000e+00> : vector<8x8xf32>
    %290 = tpu.matmul %287, %288, %cst_124 {dimension_numbers = #tpu.dot_dimension_numbers<[1], [1], [0], [0], [0, 0, 1, 0], [], []>} : vector<8x16xf32>, vector<8x16xf32>, vector<8x8xf32> -> vector<8x8xf32>
    %cst_125 = arith.constant 2.500000e-01 : f32
    %291 = vector.broadcast %cst_125 : f32 to vector<8x8xf32>
    %292 = arith.mulf %290, %291 : vector<8x8xf32>
    %293 = vector.broadcast %267 : vector<1x8xf32> to vector<8x8xf32>
    %294 = arith.addf %292, %293 : vector<8x8xf32>
    %cst_126 = arith.constant dense<0xFF800000> : vector<8xf32>
    %295 = vector.multi_reduction <maximumf>, %294, %cst_126 [1] : vector<8x8xf32> to vector<8xf32>
    %296 = vector.shape_cast %295 : vector<8xf32> to vector<8x1xf32>
    %297 = vector.broadcast %296 : vector<8x1xf32> to vector<8x8xf32>
    %298 = arith.subf %294, %297 : vector<8x8xf32>
    %299 = math.exp %298 : vector<8x8xf32>
    %cst_127 = arith.constant dense<0.000000e+00> : vector<8xf32>
    %300 = vector.multi_reduction <add>, %299, %cst_127 [1] : vector<8x8xf32> to vector<8xf32>
    %301 = vector.shape_cast %300 : vector<8xf32> to vector<8x1xf32>
    %302 = tpu.reciprocal %301 {approx = true} : vector<8x1xf32> -> vector<8x1xf32>
    %303 = vector.broadcast %302 : vector<8x1xf32> to vector<8x8xf32>
    %304 = arith.mulf %299, %303 : vector<8x8xf32>
    %cst_128 = arith.constant dense<0.000000e+00> : vector<8x16xf32>
    %305 = tpu.matmul %304, %289, %cst_128 {dimension_numbers = #tpu.dot_dimension_numbers<[1], [0], [0], [1], [0, 0, 1, 1], [], []>} : vector<8x8xf32>, vector<8x16xf32>, vector<8x16xf32> -> vector<8x16xf32>
    %306 = tpu.concatenate %286, %305 in 1 : vector<8x16xf32>, vector<8x16xf32> -> vector<8x32xf32>
    %307 = tpu.concatenate %266, %306 in 0 : vector<8x32xf32>, vector<8x32xf32> -> vector<16x32xf32>
    %cst_129 = arith.constant dense<0.000000e+00> : vector<16x32xf32>
    %308 = tpu.matmul %307, %20, %cst_129 {dimension_numbers = #tpu.dot_dimension_numbers<[1], [0], [0], [1], [0, 0, 1, 1], [], []>} : vector<16x32xf32>, vector<32x32xf32>, vector<16x32xf32> -> vector<16x32xf32>
    %309 = vector.broadcast %21 : vector<1x32xf32> to vector<16x32xf32>
    %310 = arith.addf %308, %309 : vector<16x32xf32>
    %311 = arith.addf %220, %310 : vector<16x32xf32>
    %cst_130 = arith.constant dense<0.000000e+00> : vector<16xf32>
    %312 = vector.multi_reduction <add>, %311, %cst_130 [1] : vector<16x32xf32> to vector<16xf32>
    %313 = vector.shape_cast %312 : vector<16xf32> to vector<16x1xf32>
    %cst_131 = arith.constant 3.200000e+01 : f32
    %314 = vector.broadcast %cst_131 : f32 to vector<16x1xf32>
    %315 = arith.divf %313, %314 : vector<16x1xf32>
    %316 = vector.broadcast %315 : vector<16x1xf32> to vector<16x32xf32>
    %317 = arith.subf %311, %316 : vector<16x32xf32>
    %318 = arith.mulf %317, %317 : vector<16x32xf32>
    %cst_132 = arith.constant dense<0.000000e+00> : vector<16xf32>
    %319 = vector.multi_reduction <add>, %318, %cst_132 [1] : vector<16x32xf32> to vector<16xf32>
    %320 = vector.shape_cast %319 : vector<16xf32> to vector<16x1xf32>
    %cst_133 = arith.constant 3.200000e+01 : f32
    %321 = vector.broadcast %cst_133 : f32 to vector<16x1xf32>
    %322 = arith.divf %320, %321 : vector<16x1xf32>
    %323 = vector.broadcast %315 : vector<16x1xf32> to vector<16x32xf32>
    %324 = arith.subf %311, %323 : vector<16x32xf32>
    %cst_134 = arith.constant 9.99999996E-13 : f32
    %325 = vector.broadcast %cst_134 : f32 to vector<16x1xf32>
    %326 = arith.addf %322, %325 : vector<16x1xf32>
    %327 = math.rsqrt %326 : vector<16x1xf32>
    %328 = vector.broadcast %327 : vector<16x1xf32> to vector<16x32xf32>
    %329 = arith.mulf %324, %328 : vector<16x32xf32>
    %330 = vector.broadcast %22 : vector<1x32xf32> to vector<16x32xf32>
    %331 = arith.mulf %329, %330 : vector<16x32xf32>
    %332 = vector.broadcast %23 : vector<1x32xf32> to vector<16x32xf32>
    %333 = arith.addf %331, %332 : vector<16x32xf32>
    %cst_135 = arith.constant dense<0.000000e+00> : vector<16x64xf32>
    %334 = tpu.matmul %333, %24, %cst_135 {dimension_numbers = #tpu.dot_dimension_numbers<[1], [0], [0], [1], [0, 0, 1, 1], [], []>} : vector<16x32xf32>, vector<32x64xf32>, vector<16x64xf32> -> vector<16x64xf32>
    %335 = vector.broadcast %25 : vector<1x64xf32> to vector<16x64xf32>
    %336 = arith.addf %334, %335 : vector<16x64xf32>
    %cst_136 = arith.constant 5.000000e-01 : f32
    %337 = vector.broadcast %cst_136 : f32 to vector<16x64xf32>
    %338 = arith.mulf %337, %336 : vector<16x64xf32>
    %cst_137 = arith.constant 4.471500e-02 : f32
    %339 = vector.broadcast %cst_137 : f32 to vector<16x64xf32>
    %340 = arith.mulf %339, %336 : vector<16x64xf32>
    %341 = arith.mulf %340, %336 : vector<16x64xf32>
    %342 = arith.mulf %341, %336 : vector<16x64xf32>
    %343 = arith.addf %336, %342 : vector<16x64xf32>
    %cst_138 = arith.constant 0.797884583 : f32
    %344 = vector.broadcast %cst_138 : f32 to vector<16x64xf32>
    %345 = arith.mulf %344, %343 : vector<16x64xf32>
    %346 = math.tanh %345 : vector<16x64xf32>
    %cst_139 = arith.constant 1.000000e+00 : f32
    %347 = vector.broadcast %cst_139 : f32 to vector<16x64xf32>
    %348 = arith.addf %347, %346 : vector<16x64xf32>
    %349 = arith.mulf %338, %348 : vector<16x64xf32>
    %cst_140 = arith.constant dense<0.000000e+00> : vector<16x32xf32>
    %350 = tpu.matmul %349, %26, %cst_140 {dimension_numbers = #tpu.dot_dimension_numbers<[1], [0], [0], [1], [0, 0, 1, 1], [], []>} : vector<16x64xf32>, vector<64x32xf32>, vector<16x32xf32> -> vector<16x32xf32>
    %351 = vector.broadcast %27 : vector<1x32xf32> to vector<16x32xf32>
    %352 = arith.addf %350, %351 : vector<16x32xf32>
    %353 = arith.addf %333, %352 : vector<16x32xf32>
    %cst_141 = arith.constant dense<0.000000e+00> : vector<16xf32>
    %354 = vector.multi_reduction <add>, %353, %cst_141 [1] : vector<16x32xf32> to vector<16xf32>
    %355 = vector.shape_cast %354 : vector<16xf32> to vector<16x1xf32>
    %cst_142 = arith.constant 3.200000e+01 : f32
    %356 = vector.broadcast %cst_142 : f32 to vector<16x1xf32>
    %357 = arith.divf %355, %356 : vector<16x1xf32>
    %358 = vector.broadcast %357 : vector<16x1xf32> to vector<16x32xf32>
    %359 = arith.subf %353, %358 : vector<16x32xf32>
    %360 = arith.mulf %359, %359 : vector<16x32xf32>
    %cst_143 = arith.constant dense<0.000000e+00> : vector<16xf32>
    %361 = vector.multi_reduction <add>, %360, %cst_143 [1] : vector<16x32xf32> to vector<16xf32>
    %362 = vector.shape_cast %361 : vector<16xf32> to vector<16x1xf32>
    %cst_144 = arith.constant 3.200000e+01 : f32
    %363 = vector.broadcast %cst_144 : f32 to vector<16x1xf32>
    %364 = arith.divf %362, %363 : vector<16x1xf32>
    %365 = vector.broadcast %357 : vector<16x1xf32> to vector<16x32xf32>
    %366 = arith.subf %353, %365 : vector<16x32xf32>
    %cst_145 = arith.constant 9.99999996E-13 : f32
    %367 = vector.broadcast %cst_145 : f32 to vector<16x1xf32>
    %368 = arith.addf %364, %367 : vector<16x1xf32>
    %369 = math.rsqrt %368 : vector<16x1xf32>
    %370 = vector.broadcast %369 : vector<16x1xf32> to vector<16x32xf32>
    %371 = arith.mulf %366, %370 : vector<16x32xf32>
    %372 = vector.broadcast %28 : vector<1x32xf32> to vector<16x32xf32>
    %373 = arith.mulf %371, %372 : vector<16x32xf32>
    %374 = vector.broadcast %29 : vector<1x32xf32> to vector<16x32xf32>
    %375 = arith.addf %373, %374 : vector<16x32xf32>
    %cst_146 = arith.constant dense<0.000000e+00> : vector<16x256xf32>
    %376 = tpu.matmul %375, %30, %cst_146 {dimension_numbers = #tpu.dot_dimension_numbers<[1], [0], [0], [1], [0, 0, 1, 1], [], []>} : vector<16x32xf32>, vector<32x256xf32>, vector<16x256xf32> -> vector<16x256xf32>
    %377 = vector.broadcast %31 : vector<1x256xf32> to vector<16x256xf32>
    %378 = arith.addf %376, %377 : vector<16x256xf32>
    %cst_147 = arith.constant dense<0xFF800000> : vector<16xf32>
    %379 = vector.multi_reduction <maximumf>, %378, %cst_147 [1] : vector<16x256xf32> to vector<16xf32>
    %380 = vector.shape_cast %379 : vector<16xf32> to vector<16x1xf32>
    %381 = vector.broadcast %380 : vector<16x1xf32> to vector<16x256xf32>
    %382 = arith.subf %378, %381 : vector<16x256xf32>
    %383 = math.exp %382 : vector<16x256xf32>
    %cst_148 = arith.constant dense<0.000000e+00> : vector<16xf32>
    %384 = vector.multi_reduction <add>, %383, %cst_148 [1] : vector<16x256xf32> to vector<16xf32>
    %385 = vector.shape_cast %384 : vector<16xf32> to vector<16x1xf32>
    %386 = tpu.reciprocal %385 {approx = true} : vector<16x1xf32> -> vector<16x1xf32>
    %387 = vector.broadcast %386 : vector<16x1xf32> to vector<16x256xf32>
    %388 = arith.mulf %383, %387 : vector<16x256xf32>
    %c0_149 = arith.constant 0 : index
    %c0_150 = arith.constant 0 : index
    %389 = vector.load %arg32[%c0_149, %c0_150] : memref<16x256xf32, #tpu.memory_space<vmem>>, vector<16x256xf32>
    tpu.vector_store %arg32[%c0_149, %c0_150], %388 {strides = array<i32>} : memref<16x256xf32, #tpu.memory_space<vmem>>, vector<16x256xf32>,
    return
  }
}

</mosaic_0001>

<llo_original>
// kernel: tpu_custom_call.1
$region0: #{tpu_custom_call.1}
  #allocation0 [shape = 'u32[]', space=smem, size = 0x4, offset = 0x4, fixed_abs, tag = 'smem constant byte address 0x4 - core index']
  #allocation1 [shape = 'u32[72,128]{1,0:T(1,128)}', space=vmem, size = 0x9000, scoped, tag = 'internal scratch']
  %s0 = inlined_call_operand.smem [shape: u32[33], index: -1, kind: input, shape index: {}]
  %s1 = sld [smem:[%s0]]
  %s2 = scalar_lea.smem %s0, 1
  %s3 = sld [smem:[%s2]]
  %s4 = scalar_lea.smem %s0, 2
  %s5 = sld [smem:[%s4]]
  %s6 = scalar_lea.smem %s0, 3
  %s7 = sld [smem:[%s6]]
  %s8 = scalar_lea.smem %s0, 4
  %s9 = sld [smem:[%s8]]
  %s10 = scalar_lea.smem %s0, 5
  %s11 = sld [smem:[%s10]]
  %s12 = scalar_lea.smem %s0, 6
  %s13 = sld [smem:[%s12]]
  %s14 = scalar_lea.smem %s0, 7
  %s15 = sld [smem:[%s14]]
  %s16 = scalar_lea.smem %s0, 8
  %s17 = sld [smem:[%s16]]
  %s18 = scalar_lea.smem %s0, 9
  %s19 = sld [smem:[%s18]]
  %s20 = scalar_lea.smem %s0, 10
  %s21 = sld [smem:[%s20]]
  %s22 = scalar_lea.smem %s0, 11
  %s23 = sld [smem:[%s22]]
  %s24 = scalar_lea.smem %s0, 12
  %s25 = sld [smem:[%s24]]
  %s26 = scalar_lea.smem %s0, 13
  %s27 = sld [smem:[%s26]]
  %s28 = scalar_lea.smem %s0, 14
  %s29 = sld [smem:[%s28]]
  %s30 = scalar_lea.smem %s0, 15
  %s31 = sld [smem:[%s30]]
  %s32 = scalar_lea.smem %s0, 16
  %s33 = sld [smem:[%s32]]
  %s34 = scalar_lea.smem %s0, 17
  %s35 = sld [smem:[%s34]]
  %s36 = scalar_lea.smem %s0, 18
  %s37 = sld [smem:[%s36]]
  %s38 = scalar_lea.smem %s0, 19
  %s39 = sld [smem:[%s38]]
  %s40 = scalar_lea.smem %s0, 20
  %s41 = sld [smem:[%s40]]
  %s42 = scalar_lea.smem %s0, 21
  %s43 = sld [smem:[%s42]]
  %s44 = scalar_lea.smem %s0, 22
  %s45 = sld [smem:[%s44]]
  %s46 = scalar_lea.smem %s0, 23
  %s47 = sld [smem:[%s46]]
  %s48 = scalar_lea.smem %s0, 24
  %s49 = sld [smem:[%s48]]
  %s50 = scalar_lea.smem %s0, 25
  %s51 = sld [smem:[%s50]]
  %s52 = scalar_lea.smem %s0, 26
  %s53 = sld [smem:[%s52]]
  %s54 = scalar_lea.smem %s0, 27
  %s55 = sld [smem:[%s54]]
  %s56 = scalar_lea.smem %s0, 28
  %s57 = sld [smem:[%s56]]
  %s58 = scalar_lea.smem %s0, 29
  %s59 = sld [smem:[%s58]]
  %s60 = scalar_lea.smem %s0, 30
  %s61 = sld [smem:[%s60]]
  %s62 = scalar_lea.smem %s0, 31
  %s63 = sld [smem:[%s62]]
  %s64 = scalar_lea.smem %s0, 32
  %s65 = sld [smem:[%s64]]
  %s66 = sld [smem:[#allocation0]]
  $region138: #{tpu_custom_call.1} parent=0
    _
  %s68 = ssub.s32 1, %s66
  %s69 = scalar_select 0, %s68, %s66
  $region1: #{tpu_custom_call.1} parent=0
    #allocation2 [shape = 'u8[16384]{0}', space=vmem, size = 0x4000, scoped, tag = 'output window, operand 0, single buffered']
    #allocation3 [shape = 's32[1]{0}', space=sflag, size = 0x4, scoped, tag = 'scoped memory for tpu_custom_call.1']
    %70 = vsyncpa [#allocation3], 0
    // Predicated region
    $region2: #{tpu_custom_call.1} parent=1 // pred_check
      _
    $region3: #{tpu_custom_call.1} parent=1 // pred_check_branch
      %72 = sbr.rel (0) target = $region5
    $region4: #{tpu_custom_call.1} parent=1 // pred_region
      _
    $region5: #{tpu_custom_call.1} parent=1 // pred_fallthru
      _
    // Predicated region
    $region6: #{tpu_custom_call.1} parent=1 // pred_check
      _
    $region7: #{tpu_custom_call.1} parent=1 // pred_check_branch
      %74 = sbr.rel (0) target = $region9
    $region8: #{tpu_custom_call.1} parent=1 // pred_region
      _
    $region9: #{tpu_custom_call.1} parent=1 // pred_fallthru
      _
    // Predicated region
    $region10: #{tpu_custom_call.1} parent=1 // pred_check
      _
    $region11: #{tpu_custom_call.1} parent=1 // pred_check_branch
      %76 = sbr.rel (0) target = $region13
    $region12: #{tpu_custom_call.1} parent=1 // pred_region
      _
    $region13: #{tpu_custom_call.1} parent=1 // pred_fallthru
      _
    // Predicated region
    $region14: #{tpu_custom_call.1} parent=1 // pred_check
      _
    $region15: #{tpu_custom_call.1} parent=1 // pred_check_branch
      %78 = sbr.rel (0) target = $region17
    $region16: #{tpu_custom_call.1} parent=1 // pred_region
      _
    $region17: #{tpu_custom_call.1} parent=1 // pred_fallthru
      _
    // Predicated region
    $region18: #{tpu_custom_call.1} parent=1 // pred_check
      _
    $region19: #{tpu_custom_call.1} parent=1 // pred_check_branch
      %80 = sbr.rel (0) target = $region21
    $region20: #{tpu_custom_call.1} parent=1 // pred_region
      _
    $region21: #{tpu_custom_call.1} parent=1 // pred_fallthru
      _
    // Predicated region
    $region22: #{tpu_custom_call.1} parent=1 // pred_check
      _
    $region23: #{tpu_custom_call.1} parent=1 // pred_check_branch
      %82 = sbr.rel (0) target = $region25
    $region24: #{tpu_custom_call.1} parent=1 // pred_region
      _
    $region25: #{tpu_custom_call.1} parent=1 // pred_fallthru
      _
    // Predicated region
    $region26: #{tpu_custom_call.1} parent=1 // pred_check
      _
    $region27: #{tpu_custom_call.1} parent=1 // pred_check_branch
      %84 = sbr.rel (0) target = $region29
    $region28: #{tpu_custom_call.1} parent=1 // pred_region
      _
    $region29: #{tpu_custom_call.1} parent=1 // pred_fallthru
      _
    // Predicated region
    $region30: #{tpu_custom_call.1} parent=1 // pred_check
      _
    $region31: #{tpu_custom_call.1} parent=1 // pred_check_branch
      %86 = sbr.rel (0) target = $region33
    $region32: #{tpu_custom_call.1} parent=1 // pred_region
      _
    $region33: #{tpu_custom_call.1} parent=1 // pred_fallthru
      _
    // Predicated region
    $region34: #{tpu_custom_call.1} parent=1 // pred_check
      _
    $region35: #{tpu_custom_call.1} parent=1 // pred_check_branch
      %88 = sbr.rel (0) target = $region37
    $region36: #{tpu_custom_call.1} parent=1 // pred_region
      _
    $region37: #{tpu_custom_call.1} parent=1 // pred_fallthru
      _
    // Predicated region
    $region38: #{tpu_custom_call.1} parent=1 // pred_check
      _
    $region39: #{tpu_custom_call.1} parent=1 // pred_check_branch
      %90 = sbr.rel (0) target = $region41
    $region40: #{tpu_custom_call.1} parent=1 // pred_region
      _
    $region41: #{tpu_custom_call.1} parent=1 // pred_fallthru
      _
    // Predicated region
    $region42: #{tpu_custom_call.1} parent=1 // pred_check
      _
    $region43: #{tpu_custom_call.1} parent=1 // pred_check_branch
      %92 = sbr.rel (0) target = $region45
    $region44: #{tpu_custom_call.1} parent=1 // pred_region
      _
    $region45: #{tpu_custom_call.1} parent=1 // pred_fallthru
      _
    // Predicated region
    $region46: #{tpu_custom_call.1} parent=1 // pred_check
      _
    $region47: #{tpu_custom_call.1} parent=1 // pred_check_branch
      %94 = sbr.rel (0) target = $region49
    $region48: #{tpu_custom_call.1} parent=1 // pred_region
      _
    $region49: #{tpu_custom_call.1} parent=1 // pred_fallthru
      _
    // Predicated region
    $region50: #{tpu_custom_call.1} parent=1 // pred_check
      _
    $region51: #{tpu_custom_call.1} parent=1 // pred_check_branch
      %96 = sbr.rel (0) target = $region53
    $region52: #{tpu_custom_call.1} parent=1 // pred_region
      _
    $region53: #{tpu_custom_call.1} parent=1 // pred_fallthru
      _
    // Predicated region
    $region54: #{tpu_custom_call.1} parent=1 // pred_check
      _
    $region55: #{tpu_custom_call.1} parent=1 // pred_check_branch
      %98 = sbr.rel (0) target = $region57
    $region56: #{tpu_custom_call.1} parent=1 // pred_region
      _
    $region57: #{tpu_custom_call.1} parent=1 // pred_fallthru
      _
    // Predicated region
    $region58: #{tpu_custom_call.1} parent=1 // pred_check
      _
    $region59: #{tpu_custom_call.1} parent=1 // pred_check_branch
      %100 = sbr.rel (0) target = $region61
    $region60: #{tpu_custom_call.1} parent=1 // pred_region
      _
    $region61: #{tpu_custom_call.1} parent=1 // pred_fallthru
      _
    // Predicated region
    $region62: #{tpu_custom_call.1} parent=1 // pred_check
      _
    $region63: #{tpu_custom_call.1} parent=1 // pred_check_branch
      %102 = sbr.rel (0) target = $region65
    $region64: #{tpu_custom_call.1} parent=1 // pred_region
      _
    $region65: #{tpu_custom_call.1} parent=1 // pred_fallthru
      _
    // Predicated region
    $region66: #{tpu_custom_call.1} parent=1 // pred_check
      _
    $region67: #{tpu_custom_call.1} parent=1 // pred_check_branch
      %104 = sbr.rel (0) target = $region69
    $region68: #{tpu_custom_call.1} parent=1 // pred_region
      _
    $region69: #{tpu_custom_call.1} parent=1 // pred_fallthru
      _
    // Predicated region
    $region70: #{tpu_custom_call.1} parent=1 // pred_check
      _
    $region71: #{tpu_custom_call.1} parent=1 // pred_check_branch
      %106 = sbr.rel (0) target = $region73
    $region72: #{tpu_custom_call.1} parent=1 // pred_region
      _
    $region73: #{tpu_custom_call.1} parent=1 // pred_fallthru
      _
    // Predicated region
    $region74: #{tpu_custom_call.1} parent=1 // pred_check
      _
    $region75: #{tpu_custom_call.1} parent=1 // pred_check_branch
      %108 = sbr.rel (0) target = $region77
    $region76: #{tpu_custom_call.1} parent=1 // pred_region
      _
    $region77: #{tpu_custom_call.1} parent=1 // pred_fallthru
      _
    // Predicated region
    $region78: #{tpu_custom_call.1} parent=1 // pred_check
      _
    $region79: #{tpu_custom_call.1} parent=1 // pred_check_branch
      %110 = sbr.rel (0) target = $region81
    $region80: #{tpu_custom_call.1} parent=1 // pred_region
      _
    $region81: #{tpu_custom_call.1} parent=1 // pred_fallthru
      _
    // Predicated region
    $region82: #{tpu_custom_call.1} parent=1 // pred_check
      _
    $region83: #{tpu_custom_call.1} parent=1 // pred_check_branch
      %112 = sbr.rel (0) target = $region85
    $region84: #{tpu_custom_call.1} parent=1 // pred_region
      _
    $region85: #{tpu_custom_call.1} parent=1 // pred_fallthru
      _
    // Predicated region
    $region86: #{tpu_custom_call.1} parent=1 // pred_check
      _
    $region87: #{tpu_custom_call.1} parent=1 // pred_check_branch
      %114 = sbr.rel (0) target = $region89
    $region88: #{tpu_custom_call.1} parent=1 // pred_region
      _
    $region89: #{tpu_custom_call.1} parent=1 // pred_fallthru
      _
    // Predicated region
    $region90: #{tpu_custom_call.1} parent=1 // pred_check
      _
    $region91: #{tpu_custom_call.1} parent=1 // pred_check_branch
      %116 = sbr.rel (0) target = $region93
    $region92: #{tpu_custom_call.1} parent=1 // pred_region
      _
    $region93: #{tpu_custom_call.1} parent=1 // pred_fallthru
      _
    // Predicated region
    $region94: #{tpu_custom_call.1} parent=1 // pred_check
      _
    $region95: #{tpu_custom_call.1} parent=1 // pred_check_branch
      %118 = sbr.rel (0) target = $region97
    $region96: #{tpu_custom_call.1} parent=1 // pred_region
      _
    $region97: #{tpu_custom_call.1} parent=1 // pred_fallthru
      _
    // Predicated region
    $region98: #{tpu_custom_call.1} parent=1 // pred_check
      _
    $region99: #{tpu_custom_call.1} parent=1 // pred_check_branch
      %120 = sbr.rel (0) target = $region101
    $region100: #{tpu_custom_call.1} parent=1 // pred_region
      _
    $region101: #{tpu_custom_call.1} parent=1 // pred_fallthru
      _
    // Predicated region
    $region102: #{tpu_custom_call.1} parent=1 // pred_check
      _
    $region103: #{tpu_custom_call.1} parent=1 // pred_check_branch
      %122 = sbr.rel (0) target = $region105
    $region104: #{tpu_custom_call.1} parent=1 // pred_region
      _
    $region105: #{tpu_custom_call.1} parent=1 // pred_fallthru
      _
    // Predicated region
    $region106: #{tpu_custom_call.1} parent=1 // pred_check
      _
    $region107: #{tpu_custom_call.1} parent=1 // pred_check_branch
      %124 = sbr.rel (0) target = $region109
    $region108: #{tpu_custom_call.1} parent=1 // pred_region
      _
    $region109: #{tpu_custom_call.1} parent=1 // pred_fallthru
      _
    // Predicated region
    $region110: #{tpu_custom_call.1} parent=1 // pred_check
      _
    $region111: #{tpu_custom_call.1} parent=1 // pred_check_branch
      %126 = sbr.rel (0) target = $region113
    $region112: #{tpu_custom_call.1} parent=1 // pred_region
      _
    $region113: #{tpu_custom_call.1} parent=1 // pred_fallthru
      _
    // Predicated region
    $region114: #{tpu_custom_call.1} parent=1 // pred_check
      _
    $region115: #{tpu_custom_call.1} parent=1 // pred_check_branch
      %128 = sbr.rel (0) target = $region117
    $region116: #{tpu_custom_call.1} parent=1 // pred_region
      _
    $region117: #{tpu_custom_call.1} parent=1 // pred_fallthru
      _
    // Predicated region
    $region118: #{tpu_custom_call.1} parent=1 // pred_check
      _
    $region119: #{tpu_custom_call.1} parent=1 // pred_check_branch
      %130 = sbr.rel (0) target = $region121
    $region120: #{tpu_custom_call.1} parent=1 // pred_region
      _
    $region121: #{tpu_custom_call.1} parent=1 // pred_fallthru
      _
    // Predicated region
    $region122: #{tpu_custom_call.1} parent=1 // pred_check
      _
    $region123: #{tpu_custom_call.1} parent=1 // pred_check_branch
      %132 = sbr.rel (0) target = $region125
    $region124: #{tpu_custom_call.1} parent=1 // pred_region
      _
    $region125: #{tpu_custom_call.1} parent=1 // pred_fallthru
      _
    // Predicated region
    $region126: #{tpu_custom_call.1} parent=1 // pred_check
      _
    $region127: #{tpu_custom_call.1} parent=1 // pred_check_branch
      %134 = sbr.rel (0) target = $region129
    $region128: #{tpu_custom_call.1} parent=1 // pred_region
      _
    $region129: #{tpu_custom_call.1} parent=1 // pred_fallthru
      _
    %v135 = vld [vmem:[%s1] sm:$0xff]
    %v136 = vld [vmem:[%s1 + $0x8] sm:$0xff]
    %v137 = vld [vmem:[%s3] sm:$0x3]
    %v138 = vld [vmem:[%s5] sm:$0xff]
    %v139 = vld [vmem:[%s5 + $0x8] sm:$0xff]
    %v140 = vld [vmem:[%s5 + $0x10] sm:$0xff]
    %v141 = vld [vmem:[%s5 + $0x18] sm:$0xff]
    %v142 = vld [vmem:[%s5 + $0x20] sm:$0xff]
    %v143 = vld [vmem:[%s5 + $0x28] sm:$0xff]
    %v144 = vld [vmem:[%s5 + $0x30] sm:$0xff]
    %v145 = vld [vmem:[%s5 + $0x38] sm:$0xff]
    %v146 = vld [vmem:[%s5 + $0x40] sm:$0xff]
    %v147 = vld [vmem:[%s5 + $0x48] sm:$0xff]
    %v148 = vld [vmem:[%s5 + $0x50] sm:$0xff]
    %v149 = vld [vmem:[%s5 + $0x58] sm:$0xff]
    %v150 = vld [vmem:[%s5 + $0x60] sm:$0xff]
    %v151 = vld [vmem:[%s5 + $0x68] sm:$0xff]
    %v152 = vld [vmem:[%s5 + $0x70] sm:$0xff]
    %v153 = vld [vmem:[%s5 + $0x78] sm:$0xff]
    %v154 = vld [vmem:[%s5 + $0x80] sm:$0xff]
    %v155 = vld [vmem:[%s5 + $0x88] sm:$0xff]
    %v156 = vld [vmem:[%s5 + $0x90] sm:$0xff]
    %v157 = vld [vmem:[%s5 + $0x98] sm:$0xff]
    %v158 = vld [vmem:[%s5 + $0xa0] sm:$0xff]
    %v159 = vld [vmem:[%s5 + $0xa8] sm:$0xff]
    %v160 = vld [vmem:[%s5 + $0xb0] sm:$0xff]
    %v161 = vld [vmem:[%s5 + $0xb8] sm:$0xff]
    %v162 = vld [vmem:[%s5 + $0xc0] sm:$0xff]
    %v163 = vld [vmem:[%s5 + $0xc8] sm:$0xff]
    %v164 = vld [vmem:[%s5 + $0xd0] sm:$0xff]
    %v165 = vld [vmem:[%s5 + $0xd8] sm:$0xff]
    %v166 = vld [vmem:[%s5 + $0xe0] sm:$0xff]
    %v167 = vld [vmem:[%s5 + $0xe8] sm:$0xff]
    %v168 = vld [vmem:[%s5 + $0xf0] sm:$0xff]
    %v169 = vld [vmem:[%s5 + $0xf8] sm:$0xff]
    %v170 = vld [vmem:[%s7] sm:$0xff]
    %v171 = vld [vmem:[%s9] sm:$0x1]
    %v172 = vld [vmem:[%s11] sm:$0x1]
    %v173 = vld [vmem:[%s13] sm:$0xff]
    %v174 = vld [vmem:[%s13 + $0x8] sm:$0xff]
    %v175 = vld [vmem:[%s13 + $0x10] sm:$0xff]
    %v176 = vld [vmem:[%s13 + $0x18] sm:$0xff]
    %v177 = vld [vmem:[%s15] sm:$0x1]
    %v178 = vld [vmem:[%s17] sm:$0xff]
    %v179 = vld [vmem:[%s17 + $0x8] sm:$0xff]
    %v180 = vld [vmem:[%s17 + $0x10] sm:$0xff]
    %v181 = vld [vmem:[%s17 + $0x18] sm:$0xff]
    %v182 = vld [vmem:[%s19] sm:$0x1]
    %v183 = vld [vmem:[%s21] sm:$0x1]
    %v184 = vld [vmem:[%s23] sm:$0x1]
    %v185 = vld [vmem:[%s25] sm:$0xff]
    %v186 = vld [vmem:[%s25 + $0x8] sm:$0xff]
    %v187 = vld [vmem:[%s25 + $0x10] sm:$0xff]
    %v188 = vld [vmem:[%s25 + $0x18] sm:$0xff]
    %v189 = vld [vmem:[%s27] sm:$0x1]
    %v190 = vld [vmem:[%s29] sm:$0xff]
    %v191 = vld [vmem:[%s29 + $0x8] sm:$0xff]
    %v192 = vld [vmem:[%s29 + $0x10] sm:$0xff]
    %v193 = vld [vmem:[%s29 + $0x18] sm:$0xff]
    %v194 = vld [vmem:[%s29 + $0x20] sm:$0xff]
    %v195 = vld [vmem:[%s29 + $0x28] sm:$0xff]
    %v196 = vld [vmem:[%s29 + $0x30] sm:$0xff]
    %v197 = vld [vmem:[%s29 + $0x38] sm:$0xff]
    %v198 = vld [vmem:[%s31] sm:$0x1]
    %v199 = vld [vmem:[%s33] sm:$0x1]
    %v200 = vld [vmem:[%s35] sm:$0x1]
    %v201 = vld [vmem:[%s37] sm:$0xff]
    %v202 = vld [vmem:[%s37 + $0x8] sm:$0xff]
    %v203 = vld [vmem:[%s37 + $0x10] sm:$0xff]
    %v204 = vld [vmem:[%s37 + $0x18] sm:$0xff]
    %v205 = vld [vmem:[%s39] sm:$0x1]
    %v206 = vld [vmem:[%s41] sm:$0xff]
    %v207 = vld [vmem:[%s41 + $0x8] sm:$0xff]
    %v208 = vld [vmem:[%s41 + $0x10] sm:$0xff]
    %v209 = vld [vmem:[%s41 + $0x18] sm:$0xff]
    %v210 = vld [vmem:[%s43] sm:$0x1]
    %v211 = vld [vmem:[%s45] sm:$0x1]
    %v212 = vld [vmem:[%s47] sm:$0x1]
    %v213 = vld [vmem:[%s49] sm:$0xff]
    %v214 = vld [vmem:[%s49 + $0x8] sm:$0xff]
    %v215 = vld [vmem:[%s49 + $0x10] sm:$0xff]
    %v216 = vld [vmem:[%s49 + $0x18] sm:$0xff]
    %v217 = vld [vmem:[%s51] sm:$0x1]
    %v218 = vld [vmem:[%s53] sm:$0xff]
    %v219 = vld [vmem:[%s53 + $0x8] sm:$0xff]
    %v220 = vld [vmem:[%s53 + $0x10] sm:$0xff]
    %v221 = vld [vmem:[%s53 + $0x18] sm:$0xff]
    %v222 = vld [vmem:[%s53 + $0x20] sm:$0xff]
    %v223 = vld [vmem:[%s53 + $0x28] sm:$0xff]
    %v224 = vld [vmem:[%s53 + $0x30] sm:$0xff]
    %v225 = vld [vmem:[%s53 + $0x38] sm:$0xff]
    %v226 = vld [vmem:[%s55] sm:$0x1]
    %v227 = vld [vmem:[%s57] sm:$0x1]
    %v228 = vld [vmem:[%s59] sm:$0x1]
    %v229 = vld [vmem:[%s61] sm:$0xff]
    %v230 = vld [vmem:[%s61 + $0x8] sm:$0xff]
    %v231 = vld [vmem:[%s61 + $0x10] sm:$0xff]
    %v232 = vld [vmem:[%s61 + $0x18] sm:$0xff]
    %v233 = vld [vmem:[%s61 + $0x20] sm:$0xff]
    %v234 = vld [vmem:[%s61 + $0x28] sm:$0xff]
    %v235 = vld [vmem:[%s61 + $0x30] sm:$0xff]
    %v236 = vld [vmem:[%s61 + $0x38] sm:$0xff]
    %v237 = vld [vmem:[%s63] sm:$0x3]
    %v238 = vlaneseq
    %v239 = vand.u32 %v238, 127
    %v240 = vadd.s32 %v239, 128
    %241 = vset.pattern.permute.xlu0 0
    %242 = vperm.xlu0 %241, %v135
    %v243 = vpop.permute.xlu0 %242
    %244 = vset.pattern.permute.xlu0 0
    %245 = vperm.xlu0 %244, %v136
    %v246 = vpop.permute.xlu0 %245
    %vm247 = vcmp.eq.s32.totalorder %v239, %v243
    %vm248 = vcmp.eq.s32.totalorder %v240, %v243
    %vm249 = vcmp.eq.s32.totalorder %v239, %v246
    %vm250 = vcmp.eq.s32.totalorder %v240, %v246
    %v251 = vsel %vm247, 1, 0
    %v252 = vsel %vm248, 1, 0
    %v253 = vsel %vm249, 1, 0
    %v254 = vsel %vm250, 1, 0
    %v255 = vcvt.s32.f32 %v251
    %v256 = vcvt.s32.f32 %v252
    %v257 = vcvt.s32.f32 %v253
    %v258 = vcvt.s32.f32 %v254
    %259 = vmatpush.msra.mxu0 %v153
    %260 = vmatpush.msra.mxu0 %v152
    %261 = vmatpush.msra.mxu0 %v151
    %262 = vmatpush.msra.mxu0 %v150
    %263 = vmatpush.msra.mxu0 %v149
    %264 = vmatpush.msra.mxu0 %v148
    %265 = vmatpush.msra.mxu0 %v147
    %266 = vmatpush.msra.mxu0 %v146
    %267 = vmatpush.msra.mxu0 %v145
    %268 = vmatpush.msra.mxu0 %v144
    %269 = vmatpush.msra.mxu0 %v143
    %270 = vmatpush.msra.mxu0 %v142
    %271 = vmatpush.msra.mxu0 %v141
    %272 = vmatpush.msra.mxu0 %v140
    %273 = vmatpush.msra.mxu0 %v139
    %274 = vmatpush.msra.mxu0 %v138
    %275 = vmatmul.f32.gmra.mxu0 %v255
    %v276 = vpop.f32.mrf.mxu0
    %v277 = vadd.f32 %v170, %v276
    %278 = vmatmul.f32.gmra.mxu0 %v257
    %v279 = vpop.f32.mrf.mxu0
    %v280 = vadd.f32 %v170, %v279
    %281 = vdwg.mxu0
    %282 = vmatpush.msra.mxu0 %v169
    %283 = vmatpush.msra.mxu0 %v168
    %284 = vmatpush.msra.mxu0 %v167
    %285 = vmatpush.msra.mxu0 %v166
    %286 = vmatpush.msra.mxu0 %v165
    %287 = vmatpush.msra.mxu0 %v164
    %288 = vmatpush.msra.mxu0 %v163
    %289 = vmatpush.msra.mxu0 %v162
    %290 = vmatpush.msra.mxu0 %v161
    %291 = vmatpush.msra.mxu0 %v160
    %292 = vmatpush.msra.mxu0 %v159
    %293 = vmatpush.msra.mxu0 %v158
    %294 = vmatpush.msra.mxu0 %v157
    %295 = vmatpush.msra.mxu0 %v156
    %296 = vmatpush.msra.mxu0 %v155
    %297 = vmatpush.msra.mxu0 %v154
    %298 = vmatmul.f32.gmra.mxu0 %v256
    %v299 = vpop.f32.mrf.mxu0
    %v300 = vadd.f32 %v277, %v299
    %301 = vmatmul.f32.gmra.mxu0 %v258
    %v302 = vpop.f32.mrf.mxu0
    %v303 = vadd.f32 %v280, %v302
    %304 = vdwg.mxu0
    %vm305 = vcmask 261120
    %v306 = vsel %vm305, %v300, 0.0
    %307 = vadd.xlane.f32.xlu0 %v306
    %v308 = vpop.xlane.xlu0 %307
    %v309 = vsel %vm305, %v303, 0.0
    %310 = vadd.xlane.f32.xlu0 %v309
    %v311 = vpop.xlane.xlu0 %310
    %v312 = vrcp.pop 32.0
    %v313 = vmul.f32 32.0, %v312
    %v314 = vsub.f32 1.0, %v313
    %v315 = vmul.f32 %v312, %v314
    %v316 = vadd.f32 %v312, %v315
    %vm317 = vweird.f32 %v312
    %v318 = vsel %vm317, %v312, %v316
    %v319 = vmul.f32 %v308, %v318
    %v320 = vmul.f32 %v311, %v318
    %v321 = vsub.f32 %v300, %v319
    %v322 = vsub.f32 %v303, %v320
    %v323 = vmul.f32 %v321, %v321
    %v324 = vmul.f32 %v322, %v322
    %v325 = vsel %vm305, %v323, 0.0
    %326 = vadd.xlane.f32.xlu0 %v325
    %v327 = vpop.xlane.xlu0 %326
    %v328 = vsel %vm305, %v324, 0.0
    %329 = vadd.xlane.f32.xlu0 %v328
    %v330 = vpop.xlane.xlu0 %329
    %v331 = vmul.f32 %v327, %v318
    %v332 = vmul.f32 %v330, %v318
    %v333 = vadd.f32 %v331, 1e-12
    %v334 = vadd.f32 %v332, 1e-12
    %v335 = vrsqrt.pop %v333
    %v336 = vmul.f32 %v335, %v333
    %v337 = vmul.f32 %v336, %v335
    %v338 = vmul.f32 0.5, %v337
    %v339 = vsub.f32 1.5, %v338
    %v340 = vmul.f32 %v335, %v339
    %vm341 = vweird.f32 %v333
    %vm342 = vweird.f32 %v335
    %vm343 = vmor %vm341, %vm342
    %v344 = vsel %vm343, %v335, %v340
    %v345 = vrsqrt.pop %v334
    %v346 = vmul.f32 %v345, %v334
    %v347 = vmul.f32 %v346, %v345
    %v348 = vmul.f32 0.5, %v347
    %v349 = vsub.f32 1.5, %v348
    %v350 = vmul.f32 %v345, %v349
    %vm351 = vweird.f32 %v334
    %vm352 = vweird.f32 %v345
    %vm353 = vmor %vm351, %vm352
    %v354 = vsel %vm353, %v345, %v350
    %v355 = vmul.f32 %v321, %v344
    %v356 = vmul.f32 %v322, %v354
    %v358 = vperm.slane %v171, 0
    %v360 = vmul.f32 %v355, %v358
    %v361 = vmul.f32 %v356, %v358
    %v363 = vperm.slane %v172, 0
    %v365 = vadd.f32 %v360, %v363
    %v366 = vadd.f32 %v361, %v363
    %v367 = vsub.f32 1.0, %v137
    %v368 = vmul.f32 %v367, -1e+09
    %v370 = vperm.slane %v177, 0
    %v373 = vsel %vm305, %v365, 0
    %v376 = vsel %vm305, %v366, 0
    %378 = vmatpush.msra.mxu0 0.0
    %379 = vmatpush.msra.mxu0 0.0
    %380 = vmatpush.msra.mxu0 0.0
    %381 = vmatpush.msra.mxu0 0.0
    %382 = vmatpush.msra.mxu0 0.0
    %383 = vmatpush.msra.mxu0 0.0
    %384 = vmatpush.msra.mxu0 0.0
    %385 = vmatpush.msra.mxu0 0.0
    %386 = vmatpush.msra.mxu0 0.0
    %387 = vmatpush.msra.mxu0 0.0
    %388 = vmatpush.msra.mxu0 0.0
    %389 = vmatpush.msra.mxu0 0.0
    %390 = vmatpush.msra.mxu0 %v176
    %391 = vmatpush.msra.mxu0 %v175
    %392 = vmatpush.msra.mxu0 %v174
    %393 = vmatpush.msra.mxu0 %v173
    %394 = vmatmul.f32.gmra.mxu0 %v373
    %v395 = vpop.f32.mrf.mxu0
    %v396 = vadd.f32 %v370, %v395
    %397 = vmatmul.f32.gmra.mxu0 %v376
    %v398 = vpop.f32.mrf.mxu0
    %v399 = vadd.f32 %v370, %v398
    %400 = vdwg.mxu0
    %402 = vrot.lane.b32.xlu0 %v396, 96
    %v403 = vpop.permute.xlu0 %402
    %vm404 = vcmask 130048
    %v405 = vsel %vm404, %v396, 0
    %v407 = vsel %vm404, %v403, 0
    %409 = vmatpush.xpose.msra.mxu0 0.0
    %410 = vmatpush.xpose.msra.mxu0 0.0
    %411 = vmatpush.xpose.msra.mxu0 0.0
    %412 = vmatpush.xpose.msra.mxu0 0.0
    %413 = vmatpush.xpose.msra.mxu0 0.0
    %414 = vmatpush.xpose.msra.mxu0 0.0
    %415 = vmatpush.xpose.msra.mxu0 0.0
    %416 = vmatpush.xpose.msra.mxu0 0.0
    %417 = vmatpush.xpose.msra.mxu0 0.0
    %418 = vmatpush.xpose.msra.mxu0 0.0
    %419 = vmatpush.xpose.msra.mxu0 0.0
    %420 = vmatpush.xpose.msra.mxu0 0.0
    %421 = vmatpush.xpose.msra.mxu0 0.0
    %422 = vmatpush.xpose.msra.mxu0 0.0
    %423 = vmatpush.xpose.msra.mxu0 0.0
    %424 = vmatpush.xpose.msra.mxu0 %v407
    %425 = vmatmul.f32.gmra.mxu0 %v405
    %v426 = vpop.f32.mrf.mxu0
    %v427 = vadd.f32 0.0, %v426
    %428 = vdwg.mxu0
    %v429 = vmul.f32 %v427, 0.25
    %v430 = vperm.slane %v368, 0
    %v431 = vadd.f32 %v429, %v430
    %vm432 = vcmask 64512
    %v433 = vsel %vm432, %v431, -inf
    %434 = vmax.xlane.f32.xlu0 %v433
    %v435 = vpop.xlane.xlu0 %434
    %v436 = vsub.f32 %v431, %v435
    %v437 = vmul.f32 %v436, 1.442695
    %v438 = vpow.pop %v437
    %v439 = vsel %vm432, %v438, 0.0
    %440 = vadd.xlane.f32.xlu0 %v439
    %v441 = vpop.xlane.xlu0 %440
    %v442 = vrcp.pop %v441
    %v443 = vmul.f32 %v438, %v442
    %444 = vrot.lane.b32.xlu0 %v396, 64
    %v445 = vpop.permute.xlu0 %444
    %v448 = vsel %vm432, %v443, 0
    %450 = vmatpush.msra.mxu0 0.0
    %451 = vmatpush.msra.mxu0 0.0
    %452 = vmatpush.msra.mxu0 0.0
    %453 = vmatpush.msra.mxu0 0.0
    %454 = vmatpush.msra.mxu0 0.0
    %455 = vmatpush.msra.mxu0 0.0
    %456 = vmatpush.msra.mxu0 0.0
    %457 = vmatpush.msra.mxu0 0.0
    %458 = vmatpush.msra.mxu0 0.0
    %459 = vmatpush.msra.mxu0 0.0
    %460 = vmatpush.msra.mxu0 0.0
    %461 = vmatpush.msra.mxu0 0.0
    %462 = vmatpush.msra.mxu0 0.0
    %463 = vmatpush.msra.mxu0 0.0
    %464 = vmatpush.msra.mxu0 0.0
    %465 = vmatpush.msra.mxu0 %v445
    %466 = vmatmul.f32.gmra.mxu0 %v448
    %v467 = vpop.f32.mrf.mxu0
    %v468 = vadd.f32 0.0, %v467
    %469 = vdwg.mxu0
    %470 = vrot.lane.b32.xlu0 %v396, 112
    %v471 = vpop.permute.xlu0 %470
    %472 = vrot.lane.b32.xlu0 %v396, 80
    %v473 = vpop.permute.xlu0 %472
    %v474 = vsel %vm404, %v471, 0
    %v476 = vsel %vm404, %v473, 0
    %478 = vmatpush.xpose.msra.mxu0 0.0
    %479 = vmatpush.xpose.msra.mxu0 0.0
    %480 = vmatpush.xpose.msra.mxu0 0.0
    %481 = vmatpush.xpose.msra.mxu0 0.0
    %482 = vmatpush.xpose.msra.mxu0 0.0
    %483 = vmatpush.xpose.msra.mxu0 0.0
    %484 = vmatpush.xpose.msra.mxu0 0.0
    %485 = vmatpush.xpose.msra.mxu0 0.0
    %486 = vmatpush.xpose.msra.mxu0 0.0
    %487 = vmatpush.xpose.msra.mxu0 0.0
    %488 = vmatpush.xpose.msra.mxu0 0.0
    %489 = vmatpush.xpose.msra.mxu0 0.0
    %490 = vmatpush.xpose.msra.mxu0 0.0
    %491 = vmatpush.xpose.msra.mxu0 0.0
    %492 = vmatpush.xpose.msra.mxu0 0.0
    %493 = vmatpush.xpose.msra.mxu0 %v476
    %494 = vmatmul.f32.gmra.mxu0 %v474
    %v495 = vpop.f32.mrf.mxu0
    %v496 = vadd.f32 0.0, %v495
    %497 = vdwg.mxu0
    %v498 = vmul.f32 %v496, 0.25
    %v499 = vadd.f32 %v498, %v430
    %v500 = vsel %vm432, %v499, -inf
    %501 = vmax.xlane.f32.xlu0 %v500
    %v502 = vpop.xlane.xlu0 %501
    %v503 = vsub.f32 %v499, %v502
    %v504 = vmul.f32 %v503, 1.442695
    %v505 = vpow.pop %v504
    %v506 = vsel %vm432, %v505, 0.0
    %507 = vadd.xlane.f32.xlu0 %v506
    %v508 = vpop.xlane.xlu0 %507
    %v509 = vrcp.pop %v508
    %v510 = vmul.f32 %v505, %v509
    %511 = vrot.lane.b32.xlu0 %v396, 48
    %v512 = vpop.permute.xlu0 %511
    %v515 = vsel %vm432, %v510, 0
    %517 = vmatpush.msra.mxu0 0.0
    %518 = vmatpush.msra.mxu0 0.0
    %519 = vmatpush.msra.mxu0 0.0
    %520 = vmatpush.msra.mxu0 0.0
    %521 = vmatpush.msra.mxu0 0.0
    %522 = vmatpush.msra.mxu0 0.0
    %523 = vmatpush.msra.mxu0 0.0
    %524 = vmatpush.msra.mxu0 0.0
    %525 = vmatpush.msra.mxu0 0.0
    %526 = vmatpush.msra.mxu0 0.0
    %527 = vmatpush.msra.mxu0 0.0
    %528 = vmatpush.msra.mxu0 0.0
    %529 = vmatpush.msra.mxu0 0.0
    %530 = vmatpush.msra.mxu0 0.0
    %531 = vmatpush.msra.mxu0 0.0
    %532 = vmatpush.msra.mxu0 %v512
    %533 = vmatmul.f32.gmra.mxu0 %v515
    %v534 = vpop.f32.mrf.mxu0
    %v535 = vadd.f32 0.0, %v534
    %536 = vdwg.mxu0
    %538 = vrot.lane.b32.xlu0 %v535, 16
    %v539 = vpop.permute.xlu0 %538
    %v541 = vsel %vm404, %v468, %v539
    %543 = vrot.lane.b32.xlu0 %v399, 96
    %v544 = vpop.permute.xlu0 %543
    %v545 = vsel %vm404, %v399, 0
    %v547 = vsel %vm404, %v544, 0
    %549 = vmatpush.xpose.msra.mxu0 0.0
    %550 = vmatpush.xpose.msra.mxu0 0.0
    %551 = vmatpush.xpose.msra.mxu0 0.0
    %552 = vmatpush.xpose.msra.mxu0 0.0
    %553 = vmatpush.xpose.msra.mxu0 0.0
    %554 = vmatpush.xpose.msra.mxu0 0.0
    %555 = vmatpush.xpose.msra.mxu0 0.0
    %556 = vmatpush.xpose.msra.mxu0 0.0
    %557 = vmatpush.xpose.msra.mxu0 0.0
    %558 = vmatpush.xpose.msra.mxu0 0.0
    %559 = vmatpush.xpose.msra.mxu0 0.0
    %560 = vmatpush.xpose.msra.mxu0 0.0
    %561 = vmatpush.xpose.msra.mxu0 0.0
    %562 = vmatpush.xpose.msra.mxu0 0.0
    %563 = vmatpush.xpose.msra.mxu0 0.0
    %564 = vmatpush.xpose.msra.mxu0 %v547
    %565 = vmatmul.f32.gmra.mxu0 %v545
    %v566 = vpop.f32.mrf.mxu0
    %v567 = vadd.f32 0.0, %v566
    %568 = vdwg.mxu0
    %v569 = vmul.f32 %v567, 0.25
    %v570 = vperm.slane %v368, 1
    %v571 = vadd.f32 %v569, %v570
    %v572 = vsel %vm432, %v571, -inf
    %573 = vmax.xlane.f32.xlu0 %v572
    %v574 = vpop.xlane.xlu0 %573
    %v575 = vsub.f32 %v571, %v574
    %v576 = vmul.f32 %v575, 1.442695
    %v577 = vpow.pop %v576
    %v578 = vsel %vm432, %v577, 0.0
    %579 = vadd.xlane.f32.xlu0 %v578
    %v580 = vpop.xlane.xlu0 %579
    %v581 = vrcp.pop %v580
    %v582 = vmul.f32 %v577, %v581
    %583 = vrot.lane.b32.xlu0 %v399, 64
    %v584 = vpop.permute.xlu0 %583
    %v587 = vsel %vm432, %v582, 0
    %589 = vmatpush.msra.mxu0 0.0
    %590 = vmatpush.msra.mxu0 0.0
    %591 = vmatpush.msra.mxu0 0.0
    %592 = vmatpush.msra.mxu0 0.0
    %593 = vmatpush.msra.mxu0 0.0
    %594 = vmatpush.msra.mxu0 0.0
    %595 = vmatpush.msra.mxu0 0.0
    %596 = vmatpush.msra.mxu0 0.0
    %597 = vmatpush.msra.mxu0 0.0
    %598 = vmatpush.msra.mxu0 0.0
    %599 = vmatpush.msra.mxu0 0.0
    %600 = vmatpush.msra.mxu0 0.0
    %601 = vmatpush.msra.mxu0 0.0
    %602 = vmatpush.msra.mxu0 0.0
    %603 = vmatpush.msra.mxu0 0.0
    %604 = vmatpush.msra.mxu0 %v584
    %605 = vmatmul.f32.gmra.mxu0 %v587
    %v606 = vpop.f32.mrf.mxu0
    %v607 = vadd.f32 0.0, %v606
    %608 = vdwg.mxu0
    %609 = vrot.lane.b32.xlu0 %v399, 112
    %v610 = vpop.permute.xlu0 %609
    %611 = vrot.lane.b32.xlu0 %v399, 80
    %v612 = vpop.permute.xlu0 %611
    %v613 = vsel %vm404, %v610, 0
    %v615 = vsel %vm404, %v612, 0
    %617 = vmatpush.xpose.msra.mxu0 0.0
    %618 = vmatpush.xpose.msra.mxu0 0.0
    %619 = vmatpush.xpose.msra.mxu0 0.0
    %620 = vmatpush.xpose.msra.mxu0 0.0
    %621 = vmatpush.xpose.msra.mxu0 0.0
    %622 = vmatpush.xpose.msra.mxu0 0.0
    %623 = vmatpush.xpose.msra.mxu0 0.0
    %624 = vmatpush.xpose.msra.mxu0 0.0
    %625 = vmatpush.xpose.msra.mxu0 0.0
    %626 = vmatpush.xpose.msra.mxu0 0.0
    %627 = vmatpush.xpose.msra.mxu0 0.0
    %628 = vmatpush.xpose.msra.mxu0 0.0
    %629 = vmatpush.xpose.msra.mxu0 0.0
    %630 = vmatpush.xpose.msra.mxu0 0.0
    %631 = vmatpush.xpose.msra.mxu0 0.0
    %632 = vmatpush.xpose.msra.mxu0 %v615
    %633 = vmatmul.f32.gmra.mxu0 %v613
    %v634 = vpop.f32.mrf.mxu0
    %v635 = vadd.f32 0.0, %v634
    %636 = vdwg.mxu0
    %v637 = vmul.f32 %v635, 0.25
    %v638 = vadd.f32 %v637, %v570
    %v639 = vsel %vm432, %v638, -inf
    %640 = vmax.xlane.f32.xlu0 %v639
    %v641 = vpop.xlane.xlu0 %640
    %v642 = vsub.f32 %v638, %v641
    %v643 = vmul.f32 %v642, 1.442695
    %v644 = vpow.pop %v643
    %v645 = vsel %vm432, %v644, 0.0
    %646 = vadd.xlane.f32.xlu0 %v645
    %v647 = vpop.xlane.xlu0 %646
    %v648 = vrcp.pop %v647
    %v649 = vmul.f32 %v644, %v648
    %650 = vrot.lane.b32.xlu0 %v399, 48
    %v651 = vpop.permute.xlu0 %650
    %v654 = vsel %vm432, %v649, 0
    %656 = vmatpush.msra.mxu0 0.0
    %657 = vmatpush.msra.mxu0 0.0
    %658 = vmatpush.msra.mxu0 0.0
    %659 = vmatpush.msra.mxu0 0.0
    %660 = vmatpush.msra.mxu0 0.0
    %661 = vmatpush.msra.mxu0 0.0
    %662 = vmatpush.msra.mxu0 0.0
    %663 = vmatpush.msra.mxu0 0.0
    %664 = vmatpush.msra.mxu0 0.0
    %665 = vmatpush.msra.mxu0 0.0
    %666 = vmatpush.msra.mxu0 0.0
    %667 = vmatpush.msra.mxu0 0.0
    %668 = vmatpush.msra.mxu0 0.0
    %669 = vmatpush.msra.mxu0 0.0
    %670 = vmatpush.msra.mxu0 0.0
    %671 = vmatpush.msra.mxu0 %v651
    %672 = vmatmul.f32.gmra.mxu0 %v654
    %v673 = vpop.f32.mrf.mxu0
    %v674 = vadd.f32 0.0, %v673
    %675 = vdwg.mxu0
    %677 = vrot.lane.b32.xlu0 %v674, 16
    %v678 = vpop.permute.xlu0 %677
    %v680 = vsel %vm404, %v607, %v678
    %v682 = vperm.slane %v182, 0
    %v685 = vsel %vm305, %v541, 0
    %v688 = vsel %vm305, %v680, 0
    %690 = vmatpush.msra.mxu0 0.0
    %691 = vmatpush.msra.mxu0 0.0
    %692 = vmatpush.msra.mxu0 0.0
    %693 = vmatpush.msra.mxu0 0.0
    %694 = vmatpush.msra.mxu0 0.0
    %695 = vmatpush.msra.mxu0 0.0
    %696 = vmatpush.msra.mxu0 0.0
    %697 = vmatpush.msra.mxu0 0.0
    %698 = vmatpush.msra.mxu0 0.0
    %699 = vmatpush.msra.mxu0 0.0
    %700 = vmatpush.msra.mxu0 0.0
    %701 = vmatpush.msra.mxu0 0.0
    %702 = vmatpush.msra.mxu0 %v181
    %703 = vmatpush.msra.mxu0 %v180
    %704 = vmatpush.msra.mxu0 %v179
    %705 = vmatpush.msra.mxu0 %v178
    %706 = vmatmul.f32.gmra.mxu0 %v685
    %v707 = vpop.f32.mrf.mxu0
    %v708 = vadd.f32 %v682, %v707
    %709 = vmatmul.f32.gmra.mxu0 %v688
    %v710 = vpop.f32.mrf.mxu0
    %v711 = vadd.f32 %v682, %v710
    %712 = vdwg.mxu0
    %v713 = vadd.f32 %v365, %v708
    %v714 = vadd.f32 %v366, %v711
    %v715 = vsel %vm305, %v713, 0.0
    %716 = vadd.xlane.f32.xlu0 %v715
    %v717 = vpop.xlane.xlu0 %716
    %v718 = vsel %vm305, %v714, 0.0
    %719 = vadd.xlane.f32.xlu0 %v718
    %v720 = vpop.xlane.xlu0 %719
    %v721 = vmul.f32 %v717, %v318
    %v722 = vmul.f32 %v720, %v318
    %v723 = vsub.f32 %v713, %v721
    %v724 = vsub.f32 %v714, %v722
    %v725 = vmul.f32 %v723, %v723
    %v726 = vmul.f32 %v724, %v724
    %v727 = vsel %vm305, %v725, 0.0
    %728 = vadd.xlane.f32.xlu0 %v727
    %v729 = vpop.xlane.xlu0 %728
    %v730 = vsel %vm305, %v726, 0.0
    %731 = vadd.xlane.f32.xlu0 %v730
    %v732 = vpop.xlane.xlu0 %731
    %v733 = vmul.f32 %v729, %v318
    %v734 = vmul.f32 %v732, %v318
    %v735 = vadd.f32 %v733, 1e-12
    %v736 = vadd.f32 %v734, 1e-12
    %v737 = vrsqrt.pop %v735
    %v738 = vmul.f32 %v737, %v735
    %v739 = vmul.f32 %v738, %v737
    %v740 = vmul.f32 0.5, %v739
    %v741 = vsub.f32 1.5, %v740
    %v742 = vmul.f32 %v737, %v741
    %vm743 = vweird.f32 %v735
    %vm744 = vweird.f32 %v737
    %vm745 = vmor %vm743, %vm744
    %v746 = vsel %vm745, %v737, %v742
    %v747 = vrsqrt.pop %v736
    %v748 = vmul.f32 %v747, %v736
    %v749 = vmul.f32 %v748, %v747
    %v750 = vmul.f32 0.5, %v749
    %v751 = vsub.f32 1.5, %v750
    %v752 = vmul.f32 %v747, %v751
    %vm753 = vweird.f32 %v736
    %vm754 = vweird.f32 %v747
    %vm755 = vmor %vm753, %vm754
    %v756 = vsel %vm755, %v747, %v752
    %v757 = vmul.f32 %v723, %v746
    %v758 = vmul.f32 %v724, %v756
    %v760 = vperm.slane %v183, 0
    %v762 = vmul.f32 %v757, %v760
    %v763 = vmul.f32 %v758, %v760
    %v765 = vperm.slane %v184, 0
    %v767 = vadd.f32 %v762, %v765
    %v768 = vadd.f32 %v763, %v765
    %v770 = vperm.slane %v189, 0
    %v773 = vsel %vm305, %v767, 0
    %v776 = vsel %vm305, %v768, 0
    %778 = vmatpush.msra.mxu0 0.0
    %779 = vmatpush.msra.mxu0 0.0
    %780 = vmatpush.msra.mxu0 0.0
    %781 = vmatpush.msra.mxu0 0.0
    %782 = vmatpush.msra.mxu0 0.0
    %783 = vmatpush.msra.mxu0 0.0
    %784 = vmatpush.msra.mxu0 0.0
    %785 = vmatpush.msra.mxu0 0.0
    %786 = vmatpush.msra.mxu0 0.0
    %787 = vmatpush.msra.mxu0 0.0
    %788 = vmatpush.msra.mxu0 0.0
    %789 = vmatpush.msra.mxu0 0.0
    %790 = vmatpush.msra.mxu0 %v188
    %791 = vmatpush.msra.mxu0 %v187
    %792 = vmatpush.msra.mxu0 %v186
    %793 = vmatpush.msra.mxu0 %v185
    %794 = vmatmul.f32.gmra.mxu0 %v773
    %v795 = vpop.f32.mrf.mxu0
    %v796 = vadd.f32 %v770, %v795
    %797 = vmatmul.f32.gmra.mxu0 %v776
    %v798 = vpop.f32.mrf.mxu0
    %v799 = vadd.f32 %v770, %v798
    %800 = vdwg.mxu0
    %v801 = vmul.f32 %v796, 0.5
    %v802 = vmul.f32 %v799, 0.5
    %v803 = vmul.f32 %v796, 0.044715
    %v804 = vmul.f32 %v799, 0.044715
    %v805 = vmul.f32 %v803, %v796
    %v806 = vmul.f32 %v804, %v799
    %v807 = vmul.f32 %v805, %v796
    %v808 = vmul.f32 %v806, %v799
    %v809 = vadd.f32 %v796, %v807
    %v810 = vadd.f32 %v799, %v808
    %v811 = vmul.f32 %v809, 0.7978846
    %v812 = vmul.f32 %v810, 0.7978846
    %v813 = vtanh.pop %v811
    %v814 = vtanh.pop %v812
    %v815 = vadd.f32 %v813, 1.0
    %v816 = vadd.f32 %v814, 1.0
    %v817 = vmul.f32 %v801, %v815
    %v818 = vmul.f32 %v802, %v816
    %v820 = vperm.slane %v198, 0
    %vm822 = vcmask 523264
    %v824 = vsel %vm822, %v817, 0
    %v827 = vsel %vm822, %v818, 0
    %829 = vmatpush.msra.mxu0 0.0
    %830 = vmatpush.msra.mxu0 0.0
    %831 = vmatpush.msra.mxu0 0.0
    %832 = vmatpush.msra.mxu0 0.0
    %833 = vmatpush.msra.mxu0 0.0
    %834 = vmatpush.msra.mxu0 0.0
    %835 = vmatpush.msra.mxu0 0.0
    %836 = vmatpush.msra.mxu0 0.0
    %837 = vmatpush.msra.mxu0 %v197
    %838 = vmatpush.msra.mxu0 %v196
    %839 = vmatpush.msra.mxu0 %v195
    %840 = vmatpush.msra.mxu0 %v194
    %841 = vmatpush.msra.mxu0 %v193
    %842 = vmatpush.msra.mxu0 %v192
    %843 = vmatpush.msra.mxu0 %v191
    %844 = vmatpush.msra.mxu0 %v190
    %845 = vmatmul.f32.gmra.mxu0 %v824
    %v846 = vpop.f32.mrf.mxu0
    %v847 = vadd.f32 %v820, %v846
    %848 = vmatmul.f32.gmra.mxu0 %v827
    %v849 = vpop.f32.mrf.mxu0
    %v850 = vadd.f32 %v820, %v849
    %851 = vdwg.mxu0
    %v852 = vadd.f32 %v767, %v847
    %v853 = vadd.f32 %v768, %v850
    %v854 = vsel %vm305, %v852, 0.0
    %855 = vadd.xlane.f32.xlu0 %v854
    %v856 = vpop.xlane.xlu0 %855
    %v857 = vsel %vm305, %v853, 0.0
    %858 = vadd.xlane.f32.xlu0 %v857
    %v859 = vpop.xlane.xlu0 %858
    %v860 = vmul.f32 %v856, %v318
    %v861 = vmul.f32 %v859, %v318
    %v862 = vsub.f32 %v852, %v860
    %v863 = vsub.f32 %v853, %v861
    %v864 = vmul.f32 %v862, %v862
    %v865 = vmul.f32 %v863, %v863
    %v866 = vsel %vm305, %v864, 0.0
    %867 = vadd.xlane.f32.xlu0 %v866
    %v868 = vpop.xlane.xlu0 %867
    %v869 = vsel %vm305, %v865, 0.0
    %870 = vadd.xlane.f32.xlu0 %v869
    %v871 = vpop.xlane.xlu0 %870
    %v872 = vmul.f32 %v868, %v318
    %v873 = vmul.f32 %v871, %v318
    %v874 = vadd.f32 %v872, 1e-12
    %v875 = vadd.f32 %v873, 1e-12
    %v876 = vrsqrt.pop %v874
    %v877 = vmul.f32 %v876, %v874
    %v878 = vmul.f32 %v877, %v876
    %v879 = vmul.f32 0.5, %v878
    %v880 = vsub.f32 1.5, %v879
    %v881 = vmul.f32 %v876, %v880
    %vm882 = vweird.f32 %v874
    %vm883 = vweird.f32 %v876
    %vm884 = vmor %vm882, %vm883
    %v885 = vsel %vm884, %v876, %v881
    %v886 = vrsqrt.pop %v875
    %v887 = vmul.f32 %v886, %v875
    %v888 = vmul.f32 %v887, %v886
    %v889 = vmul.f32 0.5, %v888
    %v890 = vsub.f32 1.5, %v889
    %v891 = vmul.f32 %v886, %v890
    %vm892 = vweird.f32 %v875
    %vm893 = vweird.f32 %v886
    %vm894 = vmor %vm892, %vm893
    %v895 = vsel %vm894, %v886, %v891
    %v896 = vmul.f32 %v862, %v885
    %v897 = vmul.f32 %v863, %v895
    %v899 = vperm.slane %v199, 0
    %v901 = vmul.f32 %v896, %v899
    %v902 = vmul.f32 %v897, %v899
    %v904 = vperm.slane %v200, 0
    %v906 = vadd.f32 %v901, %v904
    %v907 = vadd.f32 %v902, %v904
    %v909 = vperm.slane %v205, 0
    %v912 = vsel %vm305, %v906, 0
    %v915 = vsel %vm305, %v907, 0
    %917 = vmatpush.msra.mxu0 0.0
    %918 = vmatpush.msra.mxu0 0.0
    %919 = vmatpush.msra.mxu0 0.0
    %920 = vmatpush.msra.mxu0 0.0
    %921 = vmatpush.msra.mxu0 0.0
    %922 = vmatpush.msra.mxu0 0.0
    %923 = vmatpush.msra.mxu0 0.0
    %924 = vmatpush.msra.mxu0 0.0
    %925 = vmatpush.msra.mxu0 0.0
    %926 = vmatpush.msra.mxu0 0.0
    %927 = vmatpush.msra.mxu0 0.0
    %928 = vmatpush.msra.mxu0 0.0
    %929 = vmatpush.msra.mxu0 %v204
    %930 = vmatpush.msra.mxu0 %v203
    %931 = vmatpush.msra.mxu0 %v202
    %932 = vmatpush.msra.mxu0 %v201
    %933 = vmatmul.f32.gmra.mxu0 %v912
    %v934 = vpop.f32.mrf.mxu0
    %v935 = vadd.f32 %v909, %v934
    %936 = vmatmul.f32.gmra.mxu0 %v915
    %v937 = vpop.f32.mrf.mxu0
    %v938 = vadd.f32 %v909, %v937
    %939 = vdwg.mxu0
    %941 = vrot.lane.b32.xlu0 %v935, 96
    %v942 = vpop.permute.xlu0 %941
    %v943 = vsel %vm404, %v935, 0
    %v945 = vsel %vm404, %v942, 0
    %947 = vmatpush.xpose.msra.mxu0 0.0
    %948 = vmatpush.xpose.msra.mxu0 0.0
    %949 = vmatpush.xpose.msra.mxu0 0.0
    %950 = vmatpush.xpose.msra.mxu0 0.0
    %951 = vmatpush.xpose.msra.mxu0 0.0
    %952 = vmatpush.xpose.msra.mxu0 0.0
    %953 = vmatpush.xpose.msra.mxu0 0.0
    %954 = vmatpush.xpose.msra.mxu0 0.0
    %955 = vmatpush.xpose.msra.mxu0 0.0
    %956 = vmatpush.xpose.msra.mxu0 0.0
    %957 = vmatpush.xpose.msra.mxu0 0.0
    %958 = vmatpush.xpose.msra.mxu0 0.0
    %959 = vmatpush.xpose.msra.mxu0 0.0
    %960 = vmatpush.xpose.msra.mxu0 0.0
    %961 = vmatpush.xpose.msra.mxu0 0.0
    %962 = vmatpush.xpose.msra.mxu0 %v945
    %963 = vmatmul.f32.gmra.mxu0 %v943
    %v964 = vpop.f32.mrf.mxu0
    %v965 = vadd.f32 0.0, %v964
    %966 = vdwg.mxu0
    %v967 = vmul.f32 %v965, 0.25
    %v968 = vadd.f32 %v967, %v430
    %v969 = vsel %vm432, %v968, -inf
    %970 = vmax.xlane.f32.xlu0 %v969
    %v971 = vpop.xlane.xlu0 %970
    %v972 = vsub.f32 %v968, %v971
    %v973 = vmul.f32 %v972, 1.442695
    %v974 = vpow.pop %v973
    %v975 = vsel %vm432, %v974, 0.0
    %976 = vadd.xlane.f32.xlu0 %v975
    %v977 = vpop.xlane.xlu0 %976
    %v978 = vrcp.pop %v977
    %v979 = vmul.f32 %v974, %v978
    %980 = vrot.lane.b32.xlu0 %v935, 64
    %v981 = vpop.permute.xlu0 %980
    %v984 = vsel %vm432, %v979, 0
    %986 = vmatpush.msra.mxu0 0.0
    %987 = vmatpush.msra.mxu0 0.0
    %988 = vmatpush.msra.mxu0 0.0
    %989 = vmatpush.msra.mxu0 0.0
    %990 = vmatpush.msra.mxu0 0.0
    %991 = vmatpush.msra.mxu0 0.0
    %992 = vmatpush.msra.mxu0 0.0
    %993 = vmatpush.msra.mxu0 0.0
    %994 = vmatpush.msra.mxu0 0.0
    %995 = vmatpush.msra.mxu0 0.0
    %996 = vmatpush.msra.mxu0 0.0
    %997 = vmatpush.msra.mxu0 0.0
    %998 = vmatpush.msra.mxu0 0.0
    %999 = vmatpush.msra.mxu0 0.0
    %1000 = vmatpush.msra.mxu0 0.0
    %1001 = vmatpush.msra.mxu0 %v981
    %1002 = vmatmul.f32.gmra.mxu0 %v984
    %v1003 = vpop.f32.mrf.mxu0
    %v1004 = vadd.f32 0.0, %v1003
    %1005 = vdwg.mxu0
    %1006 = vrot.lane.b32.xlu0 %v935, 112
    %v1007 = vpop.permute.xlu0 %1006
    %1008 = vrot.lane.b32.xlu0 %v935, 80
    %v1009 = vpop.permute.xlu0 %1008
    %v1010 = vsel %vm404, %v1007, 0
    %v1012 = vsel %vm404, %v1009, 0
    %1014 = vmatpush.xpose.msra.mxu0 0.0
    %1015 = vmatpush.xpose.msra.mxu0 0.0
    %1016 = vmatpush.xpose.msra.mxu0 0.0
    %1017 = vmatpush.xpose.msra.mxu0 0.0
    %1018 = vmatpush.xpose.msra.mxu0 0.0
    %1019 = vmatpush.xpose.msra.mxu0 0.0
    %1020 = vmatpush.xpose.msra.mxu0 0.0
    %1021 = vmatpush.xpose.msra.mxu0 0.0
    %1022 = vmatpush.xpose.msra.mxu0 0.0
    %1023 = vmatpush.xpose.msra.mxu0 0.0
    %1024 = vmatpush.xpose.msra.mxu0 0.0
    %1025 = vmatpush.xpose.msra.mxu0 0.0
    %1026 = vmatpush.xpose.msra.mxu0 0.0
    %1027 = vmatpush.xpose.msra.mxu0 0.0
    %1028 = vmatpush.xpose.msra.mxu0 0.0
    %1029 = vmatpush.xpose.msra.mxu0 %v1012
    %1030 = vmatmul.f32.gmra.mxu0 %v1010
    %v1031 = vpop.f32.mrf.mxu0
    %v1032 = vadd.f32 0.0, %v1031
    %1033 = vdwg.mxu0
    %v1034 = vmul.f32 %v1032, 0.25
    %v1035 = vadd.f32 %v1034, %v430
    %v1036 = vsel %vm432, %v1035, -inf
    %1037 = vmax.xlane.f32.xlu0 %v1036
    %v1038 = vpop.xlane.xlu0 %1037
    %v1039 = vsub.f32 %v1035, %v1038
    %v1040 = vmul.f32 %v1039, 1.442695
    %v1041 = vpow.pop %v1040
    %v1042 = vsel %vm432, %v1041, 0.0
    %1043 = vadd.xlane.f32.xlu0 %v1042
    %v1044 = vpop.xlane.xlu0 %1043
    %v1045 = vrcp.pop %v1044
    %v1046 = vmul.f32 %v1041, %v1045
    %1047 = vrot.lane.b32.xlu0 %v935, 48
    %v1048 = vpop.permute.xlu0 %1047
    %v1051 = vsel %vm432, %v1046, 0
    %1053 = vmatpush.msra.mxu0 0.0
    %1054 = vmatpush.msra.mxu0 0.0
    %1055 = vmatpush.msra.mxu0 0.0
    %1056 = vmatpush.msra.mxu0 0.0
    %1057 = vmatpush.msra.mxu0 0.0
    %1058 = vmatpush.msra.mxu0 0.0
    %1059 = vmatpush.msra.mxu0 0.0
    %1060 = vmatpush.msra.mxu0 0.0
    %1061 = vmatpush.msra.mxu0 0.0
    %1062 = vmatpush.msra.mxu0 0.0
    %1063 = vmatpush.msra.mxu0 0.0
    %1064 = vmatpush.msra.mxu0 0.0
    %1065 = vmatpush.msra.mxu0 0.0
    %1066 = vmatpush.msra.mxu0 0.0
    %1067 = vmatpush.msra.mxu0 0.0
    %1068 = vmatpush.msra.mxu0 %v1048
    %1069 = vmatmul.f32.gmra.mxu0 %v1051
    %v1070 = vpop.f32.mrf.mxu0
    %v1071 = vadd.f32 0.0, %v1070
    %1072 = vdwg.mxu0
    %1074 = vrot.lane.b32.xlu0 %v1071, 16
    %v1075 = vpop.permute.xlu0 %1074
    %v1077 = vsel %vm404, %v1004, %v1075
    %1079 = vrot.lane.b32.xlu0 %v938, 96
    %v1080 = vpop.permute.xlu0 %1079
    %v1081 = vsel %vm404, %v938, 0
    %v1083 = vsel %vm404, %v1080, 0
    %1085 = vmatpush.xpose.msra.mxu0 0.0
    %1086 = vmatpush.xpose.msra.mxu0 0.0
    %1087 = vmatpush.xpose.msra.mxu0 0.0
    %1088 = vmatpush.xpose.msra.mxu0 0.0
    %1089 = vmatpush.xpose.msra.mxu0 0.0
    %1090 = vmatpush.xpose.msra.mxu0 0.0
    %1091 = vmatpush.xpose.msra.mxu0 0.0
    %1092 = vmatpush.xpose.msra.mxu0 0.0
    %1093 = vmatpush.xpose.msra.mxu0 0.0
    %1094 = vmatpush.xpose.msra.mxu0 0.0
    %1095 = vmatpush.xpose.msra.mxu0 0.0
    %1096 = vmatpush.xpose.msra.mxu0 0.0
    %1097 = vmatpush.xpose.msra.mxu0 0.0
    %1098 = vmatpush.xpose.msra.mxu0 0.0
    %1099 = vmatpush.xpose.msra.mxu0 0.0
    %1100 = vmatpush.xpose.msra.mxu0 %v1083
    %1101 = vmatmul.f32.gmra.mxu0 %v1081
    %v1102 = vpop.f32.mrf.mxu0
    %v1103 = vadd.f32 0.0, %v1102
    %1104 = vdwg.mxu0
    %v1105 = vmul.f32 %v1103, 0.25
    %v1106 = vadd.f32 %v1105, %v570
    %v1107 = vsel %vm432, %v1106, -inf
    %1108 = vmax.xlane.f32.xlu0 %v1107
    %v1109 = vpop.xlane.xlu0 %1108
    %v1110 = vsub.f32 %v1106, %v1109
    %v1111 = vmul.f32 %v1110, 1.442695
    %v1112 = vpow.pop %v1111
    %v1113 = vsel %vm432, %v1112, 0.0
    %1114 = vadd.xlane.f32.xlu0 %v1113
    %v1115 = vpop.xlane.xlu0 %1114
    %v1116 = vrcp.pop %v1115
    %v1117 = vmul.f32 %v1112, %v1116
    %1118 = vrot.lane.b32.xlu0 %v938, 64
    %v1119 = vpop.permute.xlu0 %1118
    %v1122 = vsel %vm432, %v1117, 0
    %1124 = vmatpush.msra.mxu0 0.0
    %1125 = vmatpush.msra.mxu0 0.0
    %1126 = vmatpush.msra.mxu0 0.0
    %1127 = vmatpush.msra.mxu0 0.0
    %1128 = vmatpush.msra.mxu0 0.0
    %1129 = vmatpush.msra.mxu0 0.0
    %1130 = vmatpush.msra.mxu0 0.0
    %1131 = vmatpush.msra.mxu0 0.0
    %1132 = vmatpush.msra.mxu0 0.0
    %1133 = vmatpush.msra.mxu0 0.0
    %1134 = vmatpush.msra.mxu0 0.0
    %1135 = vmatpush.msra.mxu0 0.0
    %1136 = vmatpush.msra.mxu0 0.0
    %1137 = vmatpush.msra.mxu0 0.0
    %1138 = vmatpush.msra.mxu0 0.0
    %1139 = vmatpush.msra.mxu0 %v1119
    %1140 = vmatmul.f32.gmra.mxu0 %v1122
    %v1141 = vpop.f32.mrf.mxu0
    %v1142 = vadd.f32 0.0, %v1141
    %1143 = vdwg.mxu0
    %1144 = vrot.lane.b32.xlu0 %v938, 112
    %v1145 = vpop.permute.xlu0 %1144
    %1146 = vrot.lane.b32.xlu0 %v938, 80
    %v1147 = vpop.permute.xlu0 %1146
    %v1148 = vsel %vm404, %v1145, 0
    %v1150 = vsel %vm404, %v1147, 0
    %1152 = vmatpush.xpose.msra.mxu0 0.0
    %1153 = vmatpush.xpose.msra.mxu0 0.0
    %1154 = vmatpush.xpose.msra.mxu0 0.0
    %1155 = vmatpush.xpose.msra.mxu0 0.0
    %1156 = vmatpush.xpose.msra.mxu0 0.0
    %1157 = vmatpush.xpose.msra.mxu0 0.0
    %1158 = vmatpush.xpose.msra.mxu0 0.0
    %1159 = vmatpush.xpose.msra.mxu0 0.0
    %1160 = vmatpush.xpose.msra.mxu0 0.0
    %1161 = vmatpush.xpose.msra.mxu0 0.0
    %1162 = vmatpush.xpose.msra.mxu0 0.0
    %1163 = vmatpush.xpose.msra.mxu0 0.0
    %1164 = vmatpush.xpose.msra.mxu0 0.0
    %1165 = vmatpush.xpose.msra.mxu0 0.0
    %1166 = vmatpush.xpose.msra.mxu0 0.0
    %1167 = vmatpush.xpose.msra.mxu0 %v1150
    %1168 = vmatmul.f32.gmra.mxu0 %v1148
    %v1169 = vpop.f32.mrf.mxu0
    %v1170 = vadd.f32 0.0, %v1169
    %1171 = vdwg.mxu0
    %v1172 = vmul.f32 %v1170, 0.25
    %v1173 = vadd.f32 %v1172, %v570
    %v1174 = vsel %vm432, %v1173, -inf
    %1175 = vmax.xlane.f32.xlu0 %v1174
    %v1176 = vpop.xlane.xlu0 %1175
    %v1177 = vsub.f32 %v1173, %v1176
    %v1178 = vmul.f32 %v1177, 1.442695
    %v1179 = vpow.pop %v1178
    %v1180 = vsel %vm432, %v1179, 0.0
    %1181 = vadd.xlane.f32.xlu0 %v1180
    %v1182 = vpop.xlane.xlu0 %1181
    %v1183 = vrcp.pop %v1182
    %v1184 = vmul.f32 %v1179, %v1183
    %1185 = vrot.lane.b32.xlu0 %v938, 48
    %v1186 = vpop.permute.xlu0 %1185
    %v1189 = vsel %vm432, %v1184, 0
    %1191 = vmatpush.msra.mxu0 0.0
    %1192 = vmatpush.msra.mxu0 0.0
    %1193 = vmatpush.msra.mxu0 0.0
    %1194 = vmatpush.msra.mxu0 0.0
    %1195 = vmatpush.msra.mxu0 0.0
    %1196 = vmatpush.msra.mxu0 0.0
    %1197 = vmatpush.msra.mxu0 0.0
    %1198 = vmatpush.msra.mxu0 0.0
    %1199 = vmatpush.msra.mxu0 0.0
    %1200 = vmatpush.msra.mxu0 0.0
    %1201 = vmatpush.msra.mxu0 0.0
    %1202 = vmatpush.msra.mxu0 0.0
    %1203 = vmatpush.msra.mxu0 0.0
    %1204 = vmatpush.msra.mxu0 0.0
    %1205 = vmatpush.msra.mxu0 0.0
    %1206 = vmatpush.msra.mxu0 %v1186
    %1207 = vmatmul.f32.gmra.mxu0 %v1189
    %v1208 = vpop.f32.mrf.mxu0
    %v1209 = vadd.f32 0.0, %v1208
    %1210 = vdwg.mxu0
    %1212 = vrot.lane.b32.xlu0 %v1209, 16
    %v1213 = vpop.permute.xlu0 %1212
    %v1215 = vsel %vm404, %v1142, %v1213
    %v1217 = vperm.slane %v210, 0
    %v1220 = vsel %vm305, %v1077, 0
    %v1223 = vsel %vm305, %v1215, 0
    %1225 = vmatpush.msra.mxu0 0.0
    %1226 = vmatpush.msra.mxu0 0.0
    %1227 = vmatpush.msra.mxu0 0.0
    %1228 = vmatpush.msra.mxu0 0.0
    %1229 = vmatpush.msra.mxu0 0.0
    %1230 = vmatpush.msra.mxu0 0.0
    %1231 = vmatpush.msra.mxu0 0.0
    %1232 = vmatpush.msra.mxu0 0.0
    %1233 = vmatpush.msra.mxu0 0.0
    %1234 = vmatpush.msra.mxu0 0.0
    %1235 = vmatpush.msra.mxu0 0.0
    %1236 = vmatpush.msra.mxu0 0.0
    %1237 = vmatpush.msra.mxu0 %v209
    %1238 = vmatpush.msra.mxu0 %v208
    %1239 = vmatpush.msra.mxu0 %v207
    %1240 = vmatpush.msra.mxu0 %v206
    %1241 = vmatmul.f32.gmra.mxu0 %v1220
    %v1242 = vpop.f32.mrf.mxu0
    %v1243 = vadd.f32 %v1217, %v1242
    %1244 = vmatmul.f32.gmra.mxu0 %v1223
    %v1245 = vpop.f32.mrf.mxu0
    %v1246 = vadd.f32 %v1217, %v1245
    %1247 = vdwg.mxu0
    %v1248 = vadd.f32 %v906, %v1243
    %v1249 = vadd.f32 %v907, %v1246
    %v1250 = vsel %vm305, %v1248, 0.0
    %1251 = vadd.xlane.f32.xlu0 %v1250
    %v1252 = vpop.xlane.xlu0 %1251
    %v1253 = vsel %vm305, %v1249, 0.0
    %1254 = vadd.xlane.f32.xlu0 %v1253
    %v1255 = vpop.xlane.xlu0 %1254
    %v1256 = vmul.f32 %v1252, %v318
    %v1257 = vmul.f32 %v1255, %v318
    %v1258 = vsub.f32 %v1248, %v1256
    %v1259 = vsub.f32 %v1249, %v1257
    %v1260 = vmul.f32 %v1258, %v1258
    %v1261 = vmul.f32 %v1259, %v1259
    %v1262 = vsel %vm305, %v1260, 0.0
    %1263 = vadd.xlane.f32.xlu0 %v1262
    %v1264 = vpop.xlane.xlu0 %1263
    %v1265 = vsel %vm305, %v1261, 0.0
    %1266 = vadd.xlane.f32.xlu0 %v1265
    %v1267 = vpop.xlane.xlu0 %1266
    %v1268 = vmul.f32 %v1264, %v318
    %v1269 = vmul.f32 %v1267, %v318
    %v1270 = vadd.f32 %v1268, 1e-12
    %v1271 = vadd.f32 %v1269, 1e-12
    %v1272 = vrsqrt.pop %v1270
    %v1273 = vmul.f32 %v1272, %v1270
    %v1274 = vmul.f32 %v1273, %v1272
    %v1275 = vmul.f32 0.5, %v1274
    %v1276 = vsub.f32 1.5, %v1275
    %v1277 = vmul.f32 %v1272, %v1276
    %vm1278 = vweird.f32 %v1270
    %vm1279 = vweird.f32 %v1272
    %vm1280 = vmor %vm1278, %vm1279
    %v1281 = vsel %vm1280, %v1272, %v1277
    %v1282 = vrsqrt.pop %v1271
    %v1283 = vmul.f32 %v1282, %v1271
    %v1284 = vmul.f32 %v1283, %v1282
    %v1285 = vmul.f32 0.5, %v1284
    %v1286 = vsub.f32 1.5, %v1285
    %v1287 = vmul.f32 %v1282, %v1286
    %vm1288 = vweird.f32 %v1271
    %vm1289 = vweird.f32 %v1282
    %vm1290 = vmor %vm1288, %vm1289
    %v1291 = vsel %vm1290, %v1282, %v1287
    %v1292 = vmul.f32 %v1258, %v1281
    %v1293 = vmul.f32 %v1259, %v1291
    %v1295 = vperm.slane %v211, 0
    %v1297 = vmul.f32 %v1292, %v1295
    %v1298 = vmul.f32 %v1293, %v1295
    %v1300 = vperm.slane %v212, 0
    %v1302 = vadd.f32 %v1297, %v1300
    %v1303 = vadd.f32 %v1298, %v1300
    %v1305 = vperm.slane %v217, 0
    %v1308 = vsel %vm305, %v1302, 0
    %v1311 = vsel %vm305, %v1303, 0
    %1313 = vmatpush.msra.mxu0 0.0
    %1314 = vmatpush.msra.mxu0 0.0
    %1315 = vmatpush.msra.mxu0 0.0
    %1316 = vmatpush.msra.mxu0 0.0
    %1317 = vmatpush.msra.mxu0 0.0
    %1318 = vmatpush.msra.mxu0 0.0
    %1319 = vmatpush.msra.mxu0 0.0
    %1320 = vmatpush.msra.mxu0 0.0
    %1321 = vmatpush.msra.mxu0 0.0
    %1322 = vmatpush.msra.mxu0 0.0
    %1323 = vmatpush.msra.mxu0 0.0
    %1324 = vmatpush.msra.mxu0 0.0
    %1325 = vmatpush.msra.mxu0 %v216
    %1326 = vmatpush.msra.mxu0 %v215
    %1327 = vmatpush.msra.mxu0 %v214
    %1328 = vmatpush.msra.mxu0 %v213
    %1329 = vmatmul.f32.gmra.mxu0 %v1308
    %v1330 = vpop.f32.mrf.mxu0
    %v1331 = vadd.f32 %v1305, %v1330
    %1332 = vmatmul.f32.gmra.mxu0 %v1311
    %v1333 = vpop.f32.mrf.mxu0
    %v1334 = vadd.f32 %v1305, %v1333
    %1335 = vdwg.mxu0
    %v1336 = vmul.f32 %v1331, 0.5
    %v1337 = vmul.f32 %v1334, 0.5
    %v1338 = vmul.f32 %v1331, 0.044715
    %v1339 = vmul.f32 %v1334, 0.044715
    %v1340 = vmul.f32 %v1338, %v1331
    %v1341 = vmul.f32 %v1339, %v1334
    %v1342 = vmul.f32 %v1340, %v1331
    %v1343 = vmul.f32 %v1341, %v1334
    %v1344 = vadd.f32 %v1331, %v1342
    %v1345 = vadd.f32 %v1334, %v1343
    %v1346 = vmul.f32 %v1344, 0.7978846
    %v1347 = vmul.f32 %v1345, 0.7978846
    %v1348 = vtanh.pop %v1346
    %v1349 = vtanh.pop %v1347
    %v1350 = vadd.f32 %v1348, 1.0
    %v1351 = vadd.f32 %v1349, 1.0
    %v1352 = vmul.f32 %v1336, %v1350
    %v1353 = vmul.f32 %v1337, %v1351
    %v1355 = vperm.slane %v226, 0
    %v1358 = vsel %vm822, %v1352, 0
    %v1361 = vsel %vm822, %v1353, 0
    %1363 = vmatpush.msra.mxu0 0.0
    %1364 = vmatpush.msra.mxu0 0.0
    %1365 = vmatpush.msra.mxu0 0.0
    %1366 = vmatpush.msra.mxu0 0.0
    %1367 = vmatpush.msra.mxu0 0.0
    %1368 = vmatpush.msra.mxu0 0.0
    %1369 = vmatpush.msra.mxu0 0.0
    %1370 = vmatpush.msra.mxu0 0.0
    %1371 = vmatpush.msra.mxu0 %v225
    %1372 = vmatpush.msra.mxu0 %v224
    %1373 = vmatpush.msra.mxu0 %v223
    %1374 = vmatpush.msra.mxu0 %v222
    %1375 = vmatpush.msra.mxu0 %v221
    %1376 = vmatpush.msra.mxu0 %v220
    %1377 = vmatpush.msra.mxu0 %v219
    %1378 = vmatpush.msra.mxu0 %v218
    %1379 = vmatmul.f32.gmra.mxu0 %v1358
    %v1380 = vpop.f32.mrf.mxu0
    %v1381 = vadd.f32 %v1355, %v1380
    %1382 = vmatmul.f32.gmra.mxu0 %v1361
    %v1383 = vpop.f32.mrf.mxu0
    %v1384 = vadd.f32 %v1355, %v1383
    %1385 = vdwg.mxu0
    %v1386 = vadd.f32 %v1302, %v1381
    %v1387 = vadd.f32 %v1303, %v1384
    %v1388 = vsel %vm305, %v1386, 0.0
    %1389 = vadd.xlane.f32.xlu0 %v1388
    %v1390 = vpop.xlane.xlu0 %1389
    %v1391 = vsel %vm305, %v1387, 0.0
    %1392 = vadd.xlane.f32.xlu0 %v1391
    %v1393 = vpop.xlane.xlu0 %1392
    %v1394 = vmul.f32 %v1390, %v318
    %v1395 = vmul.f32 %v1393, %v318
    %v1396 = vsub.f32 %v1386, %v1394
    %v1397 = vsub.f32 %v1387, %v1395
    %v1398 = vmul.f32 %v1396, %v1396
    %v1399 = vmul.f32 %v1397, %v1397
    %v1400 = vsel %vm305, %v1398, 0.0
    %1401 = vadd.xlane.f32.xlu0 %v1400
    %v1402 = vpop.xlane.xlu0 %1401
    %v1403 = vsel %vm305, %v1399, 0.0
    %1404 = vadd.xlane.f32.xlu0 %v1403
    %v1405 = vpop.xlane.xlu0 %1404
    %v1406 = vmul.f32 %v1402, %v318
    %v1407 = vmul.f32 %v1405, %v318
    %v1408 = vadd.f32 %v1406, 1e-12
    %v1409 = vadd.f32 %v1407, 1e-12
    %v1410 = vrsqrt.pop %v1408
    %v1411 = vmul.f32 %v1410, %v1408
    %v1412 = vmul.f32 %v1411, %v1410
    %v1413 = vmul.f32 0.5, %v1412
    %v1414 = vsub.f32 1.5, %v1413
    %v1415 = vmul.f32 %v1410, %v1414
    %vm1416 = vweird.f32 %v1408
    %vm1417 = vweird.f32 %v1410
    %vm1418 = vmor %vm1416, %vm1417
    %v1419 = vsel %vm1418, %v1410, %v1415
    %v1420 = vrsqrt.pop %v1409
    %v1421 = vmul.f32 %v1420, %v1409
    %v1422 = vmul.f32 %v1421, %v1420
    %v1423 = vmul.f32 0.5, %v1422
    %v1424 = vsub.f32 1.5, %v1423
    %v1425 = vmul.f32 %v1420, %v1424
    %vm1426 = vweird.f32 %v1409
    %vm1427 = vweird.f32 %v1420
    %vm1428 = vmor %vm1426, %vm1427
    %v1429 = vsel %vm1428, %v1420, %v1425
    %v1430 = vmul.f32 %v1396, %v1419
    %v1431 = vmul.f32 %v1397, %v1429
    %v1433 = vperm.slane %v227, 0
    %v1435 = vmul.f32 %v1430, %v1433
    %v1436 = vmul.f32 %v1431, %v1433
    %v1438 = vperm.slane %v228, 0
    %v1440 = vadd.f32 %v1435, %v1438
    %v1441 = vadd.f32 %v1436, %v1438
    %v1443 = vperm.slane %v237, 0
    %v1444 = vperm.slane %v237, 1
    %v1448 = vsel %vm305, %v1440, 0
    %v1451 = vsel %vm305, %v1441, 0
    %1453 = vmatpush.msra.mxu0 0.0
    %1454 = vmatpush.msra.mxu0 0.0
    %1455 = vmatpush.msra.mxu0 0.0
    %1456 = vmatpush.msra.mxu0 0.0
    %1457 = vmatpush.msra.mxu0 0.0
    %1458 = vmatpush.msra.mxu0 0.0
    %1459 = vmatpush.msra.mxu0 0.0
    %1460 = vmatpush.msra.mxu0 0.0
    %1461 = vmatpush.msra.mxu0 0.0
    %1462 = vmatpush.msra.mxu0 0.0
    %1463 = vmatpush.msra.mxu0 0.0
    %1464 = vmatpush.msra.mxu0 0.0
    %1465 = vmatpush.msra.mxu0 %v235
    %1466 = vmatpush.msra.mxu0 %v233
    %1467 = vmatpush.msra.mxu0 %v231
    %1468 = vmatpush.msra.mxu0 %v229
    %1469 = vmatmul.f32.gmra.mxu0 %v1448
    %v1470 = vpop.f32.mrf.mxu0
    %v1471 = vadd.f32 %v1443, %v1470
    %1472 = vmatmul.f32.gmra.mxu0 %v1451
    %v1473 = vpop.f32.mrf.mxu0
    %v1474 = vadd.f32 %v1443, %v1473
    %1475 = vdwg.mxu0
    %1476 = vmatpush.msra.mxu0 0.0
    %1477 = vmatpush.msra.mxu0 0.0
    %1478 = vmatpush.msra.mxu0 0.0
    %1479 = vmatpush.msra.mxu0 0.0
    %1480 = vmatpush.msra.mxu0 0.0
    %1481 = vmatpush.msra.mxu0 0.0
    %1482 = vmatpush.msra.mxu0 0.0
    %1483 = vmatpush.msra.mxu0 0.0
    %1484 = vmatpush.msra.mxu0 0.0
    %1485 = vmatpush.msra.mxu0 0.0
    %1486 = vmatpush.msra.mxu0 0.0
    %1487 = vmatpush.msra.mxu0 0.0
    %1488 = vmatpush.msra.mxu0 %v236
    %1489 = vmatpush.msra.mxu0 %v234
    %1490 = vmatpush.msra.mxu0 %v232
    %1491 = vmatpush.msra.mxu0 %v230
    %1492 = vmatmul.f32.gmra.mxu0 %v1448
    %v1493 = vpop.f32.mrf.mxu0
    %v1494 = vadd.f32 %v1444, %v1493
    %1495 = vmatmul.f32.gmra.mxu0 %v1451
    %v1496 = vpop.f32.mrf.mxu0
    %v1497 = vadd.f32 %v1444, %v1496
    %1498 = vdwg.mxu0
    %v1499 = vmax.f32 %v1471, %v1494
    %1500 = vmax.xlane.f32.xlu0 %v1499
    %v1501 = vpop.xlane.xlu0 %1500
    %v1502 = vmax.f32 %v1474, %v1497
    %1503 = vmax.xlane.f32.xlu0 %v1502
    %v1504 = vpop.xlane.xlu0 %1503
    %v1505 = vsub.f32 %v1471, %v1501
    %v1506 = vsub.f32 %v1494, %v1501
    %v1507 = vsub.f32 %v1474, %v1504
    %v1508 = vsub.f32 %v1497, %v1504
    %v1509 = vmul.f32 %v1505, 1.442695
    %v1510 = vpow.pop %v1509
    %v1511 = vmul.f32 %v1506, 1.442695
    %v1512 = vpow.pop %v1511
    %v1513 = vmul.f32 %v1507, 1.442695
    %v1514 = vpow.pop %v1513
    %v1515 = vmul.f32 %v1508, 1.442695
    %v1516 = vpow.pop %v1515
    %v1517 = vadd.f32 %v1510, %v1512
    %1518 = vadd.xlane.f32.xlu0 %v1517
    %v1519 = vpop.xlane.xlu0 %1518
    %v1520 = vadd.f32 %v1514, %v1516
    %1521 = vadd.xlane.f32.xlu0 %v1520
    %v1522 = vpop.xlane.xlu0 %1521
    %v1523 = vrcp.pop %v1519
    %v1524 = vrcp.pop %v1522
    %v1525 = vmul.f32 %v1510, %v1523
    %v1526 = vmul.f32 %v1512, %v1523
    %v1527 = vmul.f32 %v1514, %v1524
    %v1528 = vmul.f32 %v1516, %v1524
    %1529 = vst [vmem:[#allocation2] sm:$0xff] %v1525
    %1530 = vst [vmem:[#allocation2 + $0x8] sm:$0xff] %v1526
    %1531 = vst [vmem:[#allocation2 + $0x10] sm:$0xff] %v1527
    %1532 = vst [vmem:[#allocation2 + $0x18] sm:$0xff] %v1528
    // Predicated region
    $region130: #{tpu_custom_call.1} parent=1 // pred_check
      _
    $region131: #{tpu_custom_call.1} parent=1 // pred_check_branch
      %1534 = sbr.rel (0) target = $region133
    $region132: #{tpu_custom_call.1} parent=1 // pred_region
      %1536 = vsyncadd [#allocation3], 0
      %s1537 = sshll.u32 [#allocation2], 4
      %s1538 = int_to_ptr.vmem [resolvable:$true] %s1537
      %s1539 = sshll.u32 %s65, 4
      %s1540 = int_to_ptr.hbm [resolvable:$true] %s1539
      %1545 = dma.vmem_to_hbm [thread:$0]  %s1538, 512, %s1540, [#allocation3], 256, 256, 16
    $region133: #{tpu_custom_call.1} parent=1 // pred_fallthru
      _
    // Predicated region
    $region134: #{tpu_custom_call.1} parent=1 // pred_check
      _
    $region135: #{tpu_custom_call.1} parent=1 // pred_check_branch
      %1547 = sbr.rel (0) target = $region137
    $region136: #{tpu_custom_call.1} parent=1 // pred_region
      %1549 = dma.done [#allocation3], 512
    $region137: #{tpu_custom_call.1} parent=1 // pred_fallthru
      _
    %1550 = vsyncpa [#allocation3], 1

</llo_original>
